<compile_context>
chip_gen: v6e
topology: v6e:2x2x1
jax: 0.10.0
libtpu: 0.0.40
codegen_flags: <defaults>
</compile_context>

<pallas_src>
import functools

import jax
import jax.numpy as jnp
from jax.experimental import pallas as pl
from jax.experimental.pallas import tpu as pltpu

EPS = 1e-5
_SUBLANES = 8
_MAX_TILE_L = 8192   # 8*TILE_L*4B in + out (double-buffered) + (H,TILE_L) f32
                     # intermediates stay at a few MiB for H=32 -> fine even on
                     # v7x's 32 MiB scoped-VMEM default.


def _round_up(x, m):
    return ((x + m - 1) // m) * m


def _choose_l_tiling(L, num_groups=1):
    """Largest lane tile (<=8192) whose padding waste is bounded."""
    tile, Lp = 128, _round_up(L, 128)
    for cand in (_MAX_TILE_L, 4096, 2048, 1024, 512, 256, 128):
        Lp_c = _round_up(L, cand)
        if Lp_c - L <= max(256, L // 8):
            tile, Lp = cand, Lp_c
            break
    # Give v7x's two TensorCores >=2 grid points when the grid would otherwise
    # collapse to a single step (only when the tile is big enough to split).
    if num_groups == 1 and Lp == tile and tile >= 1024:
        tile //= 2
    return tile, Lp


# ----------------------------- Pallas kernel -------------------------------

def _flow_kernel(mode, gb, d_pt, xP_ref, w1pT_ref, w2T_ref, b2_ref, rowb_ref,
                 *rest):
    """One dense (8, TILE_L) block = `gb` sub-batches of `d_pt` point rows.

    layer1 (K=d_pt=2) -> VPU broadcast-FMAs; layer2 (K=H) -> MXU dot.
    mode: "mu"    -> decoder output
          "vel"   -> (mu - x) * s            s = 1/(1-t+eps)   (SMEM scalar)
          "euler" -> x + (mu - x) * s        s = dt/(1-t+eps)  (fused ODE step)
    """
    if mode == "mu":
        s_ref = None
        (o_ref,) = rest
    else:
        s_ref, o_ref = rest
    g = pl.program_id(0)

    for i in range(gb):                      # static, unrolled (gb = 4)
        r0 = i * d_pt
        # ---- layer 1: hT = sum_d w1[:, d] * x_row_d + row_bias  (H, TILE_L)
        acc = w1pT_ref[:, 0:1] * xP_ref[r0:r0 + 1, :].astype(jnp.float32)
        for d in range(1, d_pt):
            acc = acc + (w1pT_ref[:, d:d + 1]
                         * xP_ref[r0 + d:r0 + d + 1, :].astype(jnp.float32))
        hidden = jnp.maximum(acc + rowb_ref[:, i:i + 1], 0.0)
        # ---- layer 2: muT = W2^T @ hT + b2                      (Dout, TILE_L)
        mu = jnp.dot(w2T_ref[...], hidden,
                     preferred_element_type=jnp.float32) + b2_ref[...]
        if mode != "mu":
            xi = xP_ref[r0:r0 + d_pt, :].astype(jnp.float32)
            mu = (mu - xi) * s_ref[g * gb + i]
            if mode == "euler":
                mu = mu + xi
        o_ref[r0:r0 + d_pt, :] = mu.astype(o_ref.dtype)


# ----------------------------- wrappers ------------------------------------

def _pack_points(pt, tile_l=None):
    """(B, L, D) -> packed, padded (R, Lp) slab + metadata."""
    B, L, D = pt.shape
    assert _SUBLANES % D == 0, "point dim must divide 8 for sublane packing"
    gb = _SUBLANES // D
    G = -(-B // gb)
    B_pad = G * gb
    R = G * _SUBLANES
    if tile_l is None:
        tile_l, Lp = _choose_l_tiling(L, G)
    else:
        Lp = _round_up(L, tile_l)
    xT = jnp.swapaxes(pt, 1, 2).reshape(B * D, L)
    xP = jnp.pad(xT, ((0, R - B * D), (0, Lp - L)))
    meta = dict(B=B, L=L, D=D, gb=gb, G=G, B_pad=B_pad, R=R,
                tile_l=tile_l, Lp=Lp)
    return xP, meta


def _unpack_points(xP, meta):
    B, L, D = meta["B"], meta["L"], meta["D"]
    return jnp.swapaxes(xP[:B * D, :L].reshape(B, D, L), 1, 2)


def _build_row_bias(params, t, set_emb, d_pt, B_pad, gb):
    """Fold t, set_emb and b1 into a per-batch hidden bias -> (G, H, gb)."""
    w1, b1 = params["w1"], params["b1"]
    H = w1.shape[1]
    w1_t = w1[d_pt:d_pt + 1, :].astype(jnp.float32)      # (1, H) time row
    w1_e = w1[d_pt + 1:, :].astype(jnp.float32)          # (E, H) conditioning
    rb = t[:, None].astype(jnp.float32) * w1_t + b1.astype(jnp.float32).reshape(1, H)
    if set_emb is not None and w1_e.shape[0] > 0:
        rb = rb + set_emb.astype(jnp.float32) @ w1_e
    B = rb.shape[0]
    rb = jnp.pad(rb, ((0, B_pad - B), (0, 0)))
    G = B_pad // gb
    return rb.reshape(G, gb, H).transpose(0, 2, 1)        # (G, H, gb)


def _decoder_packed_call(params, xP, row_bias_g, scale_pad, mode, d_pt, tile_l,
                         alias_x_to_out=False):
    """Run the fused decoder kernel on a packed (R, Lp) slab."""
    w1, w2 = params["w1"], params["w2"]
    H = w1.shape[1]
    Dout = w2.shape[1]
    if mode != "mu":
        assert Dout == d_pt, "velocity/euler epilogue needs Dout == point dim"
    R, Lp = xP.shape
    G = R // _SUBLANES
    gb = _SUBLANES // d_pt

    w1pT = jnp.transpose(w1[:d_pt, :]).astype(jnp.float32)   # (H, D)
    w2T = jnp.transpose(w2).astype(jnp.float32)              # (Dout, H)
    b2c = params["b2"].reshape(Dout, 1).astype(jnp.float32)  # (Dout, 1)

    in_specs = [
        pl.BlockSpec((_SUBLANES, tile_l), lambda g, l: (g, l)),   # packed points
        pl.BlockSpec((H, d_pt), lambda g, l: (0, 0)),             # W1 point cols
        pl.BlockSpec((Dout, H), lambda g, l: (0, 0)),             # W2^T
        pl.BlockSpec((Dout, 1), lambda g, l: (0, 0)),             # b2
        pl.BlockSpec((None, H, gb), lambda g, l: (g, 0, 0)),      # per-batch bias
    ]
    inputs = [xP, w1pT, w2T, b2c, row_bias_g]
    if mode != "mu":
        in_specs.append(pl.BlockSpec(memory_space=pltpu.MemorySpace.SMEM))
        inputs.append(scale_pad.astype(jnp.float32))              # (B_pad,) SMEM

    itemsize = jnp.dtype(xP.dtype).itemsize
    flops = 2 * G * gb * Lp * (d_pt * H + H * Dout)
    bytes_accessed = int(2 * R * Lp * itemsize                  # dense in + out
                         + (H * d_pt + Dout * H + Dout) * 4
                         + G * H * gb * 4
                         + (0 if mode == "mu" else G * gb * 4))

    kernel = functools.partial(_flow_kernel, mode, gb, d_pt)

    return pl.pallas_call(
        kernel,
        out_shape=jax.ShapeDtypeStruct((R, Lp), xP.dtype),
        grid_spec=pltpu.PrefetchScalarGridSpec(
            num_scalar_prefetch=0,
            grid=(G, Lp // tile_l),
            in_specs=in_specs,
            out_specs=pl.BlockSpec((_SUBLANES, tile_l), lambda g, l: (g, l)),
        ),
        compiler_params=pltpu.CompilerParams(
            dimension_semantics=("parallel", "parallel")),
        cost_estimate=pl.CostEstimate(flops=flops, transcendentals=0,
                                      bytes_accessed=bytes_accessed),
        input_output_aliases=({0: 0} if alias_x_to_out else {}),
    )(*inputs)


def flow_forward(params, pt, t, set_emb=None, attn_mask=None):
    """Flow.forward: return decoder(pt, t, set_emb).  pt: (B, L, D)."""
    D = pt.shape[-1]
    xP, m = _pack_points(pt)
    rb = _build_row_bias(params, t, set_emb, D, m["B_pad"], m["gb"])
    outP = _decoder_packed_call(params, xP, rb, None, "mu", D, m["tile_l"])
    return _unpack_points(outP, m)


def flow_velocity(params, x, t, set_emb=None):
    """Flow.velocity: (decoder(x, t, None) - x) / (1 - t[..., None] + eps)."""
    D = x.shape[-1]
    xP, m = _pack_points(x)
    rb = _build_row_bias(params, t, set_emb, D, m["B_pad"], m["gb"])
    s = 1.0 / (1.0 - t.astype(jnp.float32) + EPS)
    s = jnp.pad(s, (0, m["B_pad"] - m["B"]))
    outP = _decoder_packed_call(params, xP, rb, s, "vel", D, m["tile_l"])
    return _unpack_points(outP, m)


def flow_sample(params, key, batch_size, steps=50, set_emb=None):
    """Flow.sample: Euler-integrate dx/dt = velocity(x, t) from N(0, I).

    The state stays in the packed sublane/lane-dense layout for the whole
    integration; each step is ONE pallas_call (decoder + velocity + Euler
    update fused, state aliased to the output).
    """
    D = 2
    x0 = jax.random.normal(key, (1, batch_size, D), jnp.float32)
    xP, m = _pack_points(x0)
    dt = 1.0 / max(steps - 1, 1)

    def step(k, carry):
        t_k = k.astype(jnp.float32) * dt
        t_b = jnp.full((m["B"],), t_k, jnp.float32)
        rb = _build_row_bias(params, t_b, None, D, m["B_pad"], m["gb"])
        s = jnp.full((m["B_pad"],), dt, jnp.float32) / (1.0 - t_k + EPS)
        return _decoder_packed_call(params, carry, rb, s, "euler", D,
                                    m["tile_l"], alias_x_to_out=True)

    xP = jax.lax.fori_loop(0, steps - 1, step, xP)
    return _unpack_points(xP, m)


# TODO(synk): hungarian() (host-side python-dict assignment matching) and
# get_loss()'s AffineProbPath/CondOTScheduler path.sample have no clean Pallas
# equivalent and are not implemented here.


def init_params(key, din, hidden, dout, dtype=jnp.float32):
    k1, k2 = jax.random.split(key)
    w1 = jax.random.normal(k1, (din, hidden), dtype) / jnp.sqrt(jnp.asarray(din, dtype))
    w2 = jax.random.normal(k2, (hidden, dout), dtype) / jnp.sqrt(jnp.asarray(hidden, dtype))
    b1 = jnp.zeros((1, hidden), dtype)
    b2 = jnp.zeros((1, dout), dtype)
    return {"w1": w1, "b1": b1, "w2": w2, "b2": b2}


if __name__ == "__main__":
    B, L, D = 2, 384, 2      # batch, points per set, point dim (sample() uses 2)
    E, H = 16, 32            # set-embedding dim, hidden dim
    SAMPLE_N, SAMPLE_STEPS = 64, 6

    key = jax.random.PRNGKey(0)
    kpt, kt, kemb, kparam, ksmp = jax.random.split(key, 5)

    pt = jax.random.normal(kpt, (B, L, D), jnp.float32)
    t = jax.random.uniform(kt, (B,), jnp.float32)
    set_emb = jax.random.normal(kemb, (B, E), jnp.float32)
    params = init_params(kparam, din=D + 1 + E, hidden=H, dout=D)

    fwd = jax.jit(flow_forward)
    vel = jax.jit(flow_velocity)
    smp = jax.jit(functools.partial(flow_sample, batch_size=SAMPLE_N,
                                    steps=SAMPLE_STEPS))

    mu = fwd(params, pt, t, set_emb)          # forward(pt, t, set_emb)
    v = vel(params, pt, t)                    # velocity(x, t): no conditioning
    xs = smp(params, ksmp)                    # fused-Euler sampler
    jax.block_until_ready((mu, v, xs))

    # ---- plain-JAX references ----
    w1, b1, w2, b2 = params["w1"], params["b1"], params["w2"], params["b2"]
    t_feat = jnp.broadcast_to(t[:, None, None], (B, L, 1))
    emb_feat = jnp.broadcast_to(set_emb[:, None, :], (B, L, E))

    feats = jnp.concatenate([pt, t_feat, emb_feat], -1).reshape(B * L, D + 1 + E)
    mu_ref = (jnp.maximum(feats @ w1 + b1, 0.0) @ w2 + b2).reshape(B, L, D)

    feats0 = jnp.concatenate([pt, t_feat], -1).reshape(B * L, D + 1)
    mu0_ref = (jnp.maximum(feats0 @ w1[:D + 1] + b1, 0.0) @ w2 + b2).reshape(B, L, D)
    v_ref = (mu0_ref - pt) / (1.0 - t[:, None, None] + EPS)

    def ref_decoder(x, tb):
        b_, l_, d_ = x.shape
        tf = jnp.broadcast_to(tb[:, None, None], (b_, l_, 1))
        f = jnp.concatenate([x, tf], -1).reshape(b_ * l_, d_ + 1)
        return (jnp.maximum(f @ w1[:d_ + 1] + b1, 0.0) @ w2 + b2).reshape(b_, l_, d_)

    x_ref = jax.random.normal(ksmp, (1, SAMPLE_N, 2), jnp.float32)
    dt_ref = 1.0 / (SAMPLE_STEPS - 1)
    for k in range(SAMPLE_STEPS - 1):
        tk = k * dt_ref
        tb = jnp.full((1,), tk, jnp.float32)
        vk = (ref_decoder(x_ref, tb) - x_ref) / (1.0 - tk + EPS)
        x_ref = x_ref + dt_ref * vk

    assert jnp.allclose(mu, mu_ref, atol=1e-4, rtol=1e-4), \
        float(jnp.max(jnp.abs(mu - mu_ref)))
    assert jnp.allclose(v, v_ref, atol=1e-3, rtol=1e-3), \
        float(jnp.max(jnp.abs(v - v_ref)))
    assert jnp.allclose(xs, x_ref, atol=1e-3, rtol=1e-3), \
        float(jnp.max(jnp.abs(xs - x_ref)))

    print("KERNEL_OK")
</pallas_src>

<mosaic_0001>
module attributes {stable_mosaic.version = 11 : i64} {
  func.func @_flow_kernel(%arg0: i32, %arg1: i32, %arg2: memref<8x512xf32, #tpu.memory_space<vmem>>, %arg3: memref<32x2xf32, #tpu.memory_space<vmem>>, %arg4: memref<2x32xf32, #tpu.memory_space<vmem>>, %arg5: memref<2x1xf32, #tpu.memory_space<vmem>>, %arg6: memref<1x32x4xf32, #tpu.memory_space<vmem>>, %arg7: memref<8x512xf32, #tpu.memory_space<vmem>>) attributes {dimension_semantics = [#tpu.dimension_semantics<parallel>, #tpu.dimension_semantics<parallel>], iteration_bounds = array<i64: 1, 1>, scalar_prefetch = 0 : i64, scratch_operands = 0 : i64, tpu.core_type = #tpu.core_type<tc>, window_params = [{transform_indices = @transform_0, window_bounds = array<i64: 8, 512>}, {pipeline_mode = #tpu.pipeline_mode<synchronous>, transform_indices = @transform_1, window_bounds = array<i64: 32, 2>}, {pipeline_mode = #tpu.pipeline_mode<synchronous>, transform_indices = @transform_2, window_bounds = array<i64: 2, 32>}, {pipeline_mode = #tpu.pipeline_mode<synchronous>, transform_indices = @transform_3, window_bounds = array<i64: 2, 1>}, {transform_indices = @transform_4, window_bounds = array<i64: 1, 32, 4>}, {transform_indices = @transform_5, window_bounds = array<i64: 8, 512>}]} {
    %c0 = arith.constant 0 : index
    %c0_0 = arith.constant 0 : index
    %0 = vector.load %arg3[%c0, %c0_0] : memref<32x2xf32, #tpu.memory_space<vmem>>, vector<32x1xf32>
    %c0_1 = arith.constant 0 : index
    %c0_2 = arith.constant 0 : index
    %1 = vector.load %arg2[%c0_1, %c0_2] : memref<8x512xf32, #tpu.memory_space<vmem>>, vector<1x512xf32>
    %2 = vector.broadcast %0 : vector<32x1xf32> to vector<32x512xf32>
    %3 = vector.broadcast %1 : vector<1x512xf32> to vector<32x512xf32>
    %4 = arith.mulf %2, %3 : vector<32x512xf32>
    %c0_3 = arith.constant 0 : index
    %c1 = arith.constant 1 : index
    %5 = vector.load %arg3[%c0_3, %c1] : memref<32x2xf32, #tpu.memory_space<vmem>>, vector<32x1xf32>
    %c1_4 = arith.constant 1 : index
    %c0_5 = arith.constant 0 : index
    %6 = vector.load %arg2[%c1_4, %c0_5] : memref<8x512xf32, #tpu.memory_space<vmem>>, vector<1x512xf32>
    %7 = vector.broadcast %5 : vector<32x1xf32> to vector<32x512xf32>
    %8 = vector.broadcast %6 : vector<1x512xf32> to vector<32x512xf32>
    %9 = arith.mulf %7, %8 : vector<32x512xf32>
    %10 = arith.addf %4, %9 : vector<32x512xf32>
    %c0_6 = arith.constant 0 : index
    %c0_7 = arith.constant 0 : index
    %c0_8 = arith.constant 0 : index
    %11 = vector.load %arg6[%c0_6, %c0_7, %c0_8] : memref<1x32x4xf32, #tpu.memory_space<vmem>>, vector<1x32x1xf32>
    %12 = vector.shape_cast %11 : vector<1x32x1xf32> to vector<32x1xf32>
    %13 = vector.broadcast %12 : vector<32x1xf32> to vector<32x512xf32>
    %14 = arith.addf %10, %13 : vector<32x512xf32>
    %cst = arith.constant 0.000000e+00 : f32
    %15 = vector.broadcast %cst : f32 to vector<32x512xf32>
    %16 = arith.maximumf %14, %15 : vector<32x512xf32>
    %c0_9 = arith.constant 0 : index
    %c0_10 = arith.constant 0 : index
    %17 = vector.load %arg4[%c0_9, %c0_10] : memref<2x32xf32, #tpu.memory_space<vmem>>, vector<2x32xf32>
    %cst_11 = arith.constant dense<0.000000e+00> : vector<2x512xf32>
    %18 = tpu.matmul %17, %16, %cst_11 {dimension_numbers = #tpu.dot_dimension_numbers<[1], [0], [0], [1], [0, 0, 1, 1], [], []>} : vector<2x32xf32>, vector<32x512xf32>, vector<2x512xf32> -> vector<2x512xf32>
    %c0_12 = arith.constant 0 : index
    %c0_13 = arith.constant 0 : index
    %19 = vector.load %arg5[%c0_12, %c0_13] : memref<2x1xf32, #tpu.memory_space<vmem>>, vector<2x1xf32>
    %20 = vector.broadcast %19 : vector<2x1xf32> to vector<2x512xf32>
    %21 = arith.addf %18, %20 : vector<2x512xf32>
    %c0_14 = arith.constant 0 : index
    %c0_15 = arith.constant 0 : index
    %22 = vector.load %arg7[%c0_14, %c0_15] : memref<8x512xf32, #tpu.memory_space<vmem>>, vector<2x512xf32>
    tpu.vector_store %arg7[%c0_14, %c0_15], %21 {strides = array<i32>} : memref<8x512xf32, #tpu.memory_space<vmem>>, vector<2x512xf32>,
    %c0_16 = arith.constant 0 : index
    %c0_17 = arith.constant 0 : index
    %23 = vector.load %arg3[%c0_16, %c0_17] : memref<32x2xf32, #tpu.memory_space<vmem>>, vector<32x1xf32>
    %c2 = arith.constant 2 : index
    %c0_18 = arith.constant 0 : index
    %24 = vector.load %arg2[%c2, %c0_18] : memref<8x512xf32, #tpu.memory_space<vmem>>, vector<1x512xf32>
    %25 = vector.broadcast %23 : vector<32x1xf32> to vector<32x512xf32>
    %26 = vector.broadcast %24 : vector<1x512xf32> to vector<32x512xf32>
    %27 = arith.mulf %25, %26 : vector<32x512xf32>
    %c0_19 = arith.constant 0 : index
    %c1_20 = arith.constant 1 : index
    %28 = vector.load %arg3[%c0_19, %c1_20] : memref<32x2xf32, #tpu.memory_space<vmem>>, vector<32x1xf32>
    %c3 = arith.constant 3 : index
    %c0_21 = arith.constant 0 : index
    %29 = vector.load %arg2[%c3, %c0_21] : memref<8x512xf32, #tpu.memory_space<vmem>>, vector<1x512xf32>
    %30 = vector.broadcast %28 : vector<32x1xf32> to vector<32x512xf32>
    %31 = vector.broadcast %29 : vector<1x512xf32> to vector<32x512xf32>
    %32 = arith.mulf %30, %31 : vector<32x512xf32>
    %33 = arith.addf %27, %32 : vector<32x512xf32>
    %c0_22 = arith.constant 0 : index
    %c0_23 = arith.constant 0 : index
    %c1_24 = arith.constant 1 : index
    %34 = vector.load %arg6[%c0_22, %c0_23, %c1_24] : memref<1x32x4xf32, #tpu.memory_space<vmem>>, vector<1x32x1xf32>
    %35 = vector.shape_cast %34 : vector<1x32x1xf32> to vector<32x1xf32>
    %36 = vector.broadcast %35 : vector<32x1xf32> to vector<32x512xf32>
    %37 = arith.addf %33, %36 : vector<32x512xf32>
    %cst_25 = arith.constant 0.000000e+00 : f32
    %38 = vector.broadcast %cst_25 : f32 to vector<32x512xf32>
    %39 = arith.maximumf %37, %38 : vector<32x512xf32>
    %c0_26 = arith.constant 0 : index
    %c0_27 = arith.constant 0 : index
    %40 = vector.load %arg4[%c0_26, %c0_27] : memref<2x32xf32, #tpu.memory_space<vmem>>, vector<2x32xf32>
    %cst_28 = arith.constant dense<0.000000e+00> : vector<2x512xf32>
    %41 = tpu.matmul %40, %39, %cst_28 {dimension_numbers = #tpu.dot_dimension_numbers<[1], [0], [0], [1], [0, 0, 1, 1], [], []>} : vector<2x32xf32>, vector<32x512xf32>, vector<2x512xf32> -> vector<2x512xf32>
    %c0_29 = arith.constant 0 : index
    %c0_30 = arith.constant 0 : index
    %42 = vector.load %arg5[%c0_29, %c0_30] : memref<2x1xf32, #tpu.memory_space<vmem>>, vector<2x1xf32>
    %43 = vector.broadcast %42 : vector<2x1xf32> to vector<2x512xf32>
    %44 = arith.addf %41, %43 : vector<2x512xf32>
    %c2_31 = arith.constant 2 : index
    %c0_32 = arith.constant 0 : index
    %45 = vector.load %arg7[%c2_31, %c0_32] : memref<8x512xf32, #tpu.memory_space<vmem>>, vector<2x512xf32>
    tpu.vector_store %arg7[%c2_31, %c0_32], %44 {strides = array<i32>} : memref<8x512xf32, #tpu.memory_space<vmem>>, vector<2x512xf32>,
    %c0_33 = arith.constant 0 : index
    %c0_34 = arith.constant 0 : index
    %46 = vector.load %arg3[%c0_33, %c0_34] : memref<32x2xf32, #tpu.memory_space<vmem>>, vector<32x1xf32>
    %c4 = arith.constant 4 : index
    %c0_35 = arith.constant 0 : index
    %47 = vector.load %arg2[%c4, %c0_35] : memref<8x512xf32, #tpu.memory_space<vmem>>, vector<1x512xf32>
    %48 = vector.broadcast %46 : vector<32x1xf32> to vector<32x512xf32>
    %49 = vector.broadcast %47 : vector<1x512xf32> to vector<32x512xf32>
    %50 = arith.mulf %48, %49 : vector<32x512xf32>
    %c0_36 = arith.constant 0 : index
    %c1_37 = arith.constant 1 : index
    %51 = vector.load %arg3[%c0_36, %c1_37] : memref<32x2xf32, #tpu.memory_space<vmem>>, vector<32x1xf32>
    %c5 = arith.constant 5 : index
    %c0_38 = arith.constant 0 : index
    %52 = vector.load %arg2[%c5, %c0_38] : memref<8x512xf32, #tpu.memory_space<vmem>>, vector<1x512xf32>
    %53 = vector.broadcast %51 : vector<32x1xf32> to vector<32x512xf32>
    %54 = vector.broadcast %52 : vector<1x512xf32> to vector<32x512xf32>
    %55 = arith.mulf %53, %54 : vector<32x512xf32>
    %56 = arith.addf %50, %55 : vector<32x512xf32>
    %c0_39 = arith.constant 0 : index
    %c0_40 = arith.constant 0 : index
    %c2_41 = arith.constant 2 : index
    %57 = vector.load %arg6[%c0_39, %c0_40, %c2_41] : memref<1x32x4xf32, #tpu.memory_space<vmem>>, vector<1x32x1xf32>
    %58 = vector.shape_cast %57 : vector<1x32x1xf32> to vector<32x1xf32>
    %59 = vector.broadcast %58 : vector<32x1xf32> to vector<32x512xf32>
    %60 = arith.addf %56, %59 : vector<32x512xf32>
    %cst_42 = arith.constant 0.000000e+00 : f32
    %61 = vector.broadcast %cst_42 : f32 to vector<32x512xf32>
    %62 = arith.maximumf %60, %61 : vector<32x512xf32>
    %c0_43 = arith.constant 0 : index
    %c0_44 = arith.constant 0 : index
    %63 = vector.load %arg4[%c0_43, %c0_44] : memref<2x32xf32, #tpu.memory_space<vmem>>, vector<2x32xf32>
    %cst_45 = arith.constant dense<0.000000e+00> : vector<2x512xf32>
    %64 = tpu.matmul %63, %62, %cst_45 {dimension_numbers = #tpu.dot_dimension_numbers<[1], [0], [0], [1], [0, 0, 1, 1], [], []>} : vector<2x32xf32>, vector<32x512xf32>, vector<2x512xf32> -> vector<2x512xf32>
    %c0_46 = arith.constant 0 : index
    %c0_47 = arith.constant 0 : index
    %65 = vector.load %arg5[%c0_46, %c0_47] : memref<2x1xf32, #tpu.memory_space<vmem>>, vector<2x1xf32>
    %66 = vector.broadcast %65 : vector<2x1xf32> to vector<2x512xf32>
    %67 = arith.addf %64, %66 : vector<2x512xf32>
    %c4_48 = arith.constant 4 : index
    %c0_49 = arith.constant 0 : index
    %68 = vector.load %arg7[%c4_48, %c0_49] : memref<8x512xf32, #tpu.memory_space<vmem>>, vector<2x512xf32>
    tpu.vector_store %arg7[%c4_48, %c0_49], %67 {strides = array<i32>} : memref<8x512xf32, #tpu.memory_space<vmem>>, vector<2x512xf32>,
    %c0_50 = arith.constant 0 : index
    %c0_51 = arith.constant 0 : index
    %69 = vector.load %arg3[%c0_50, %c0_51] : memref<32x2xf32, #tpu.memory_space<vmem>>, vector<32x1xf32>
    %c6 = arith.constant 6 : index
    %c0_52 = arith.constant 0 : index
    %70 = vector.load %arg2[%c6, %c0_52] : memref<8x512xf32, #tpu.memory_space<vmem>>, vector<1x512xf32>
    %71 = vector.broadcast %69 : vector<32x1xf32> to vector<32x512xf32>
    %72 = vector.broadcast %70 : vector<1x512xf32> to vector<32x512xf32>
    %73 = arith.mulf %71, %72 : vector<32x512xf32>
    %c0_53 = arith.constant 0 : index
    %c1_54 = arith.constant 1 : index
    %74 = vector.load %arg3[%c0_53, %c1_54] : memref<32x2xf32, #tpu.memory_space<vmem>>, vector<32x1xf32>
    %c7 = arith.constant 7 : index
    %c0_55 = arith.constant 0 : index
    %75 = vector.load %arg2[%c7, %c0_55] : memref<8x512xf32, #tpu.memory_space<vmem>>, vector<1x512xf32>
    %76 = vector.broadcast %74 : vector<32x1xf32> to vector<32x512xf32>
    %77 = vector.broadcast %75 : vector<1x512xf32> to vector<32x512xf32>
    %78 = arith.mulf %76, %77 : vector<32x512xf32>
    %79 = arith.addf %73, %78 : vector<32x512xf32>
    %c0_56 = arith.constant 0 : index
    %c0_57 = arith.constant 0 : index
    %c3_58 = arith.constant 3 : index
    %80 = vector.load %arg6[%c0_56, %c0_57, %c3_58] : memref<1x32x4xf32, #tpu.memory_space<vmem>>, vector<1x32x1xf32>
    %81 = vector.shape_cast %80 : vector<1x32x1xf32> to vector<32x1xf32>
    %82 = vector.broadcast %81 : vector<32x1xf32> to vector<32x512xf32>
    %83 = arith.addf %79, %82 : vector<32x512xf32>
    %cst_59 = arith.constant 0.000000e+00 : f32
    %84 = vector.broadcast %cst_59 : f32 to vector<32x512xf32>
    %85 = arith.maximumf %83, %84 : vector<32x512xf32>
    %c0_60 = arith.constant 0 : index
    %c0_61 = arith.constant 0 : index
    %86 = vector.load %arg4[%c0_60, %c0_61] : memref<2x32xf32, #tpu.memory_space<vmem>>, vector<2x32xf32>
    %cst_62 = arith.constant dense<0.000000e+00> : vector<2x512xf32>
    %87 = tpu.matmul %86, %85, %cst_62 {dimension_numbers = #tpu.dot_dimension_numbers<[1], [0], [0], [1], [0, 0, 1, 1], [], []>} : vector<2x32xf32>, vector<32x512xf32>, vector<2x512xf32> -> vector<2x512xf32>
    %c0_63 = arith.constant 0 : index
    %c0_64 = arith.constant 0 : index
    %88 = vector.load %arg5[%c0_63, %c0_64] : memref<2x1xf32, #tpu.memory_space<vmem>>, vector<2x1xf32>
    %89 = vector.broadcast %88 : vector<2x1xf32> to vector<2x512xf32>
    %90 = arith.addf %87, %89 : vector<2x512xf32>
    %c6_65 = arith.constant 6 : index
    %c0_66 = arith.constant 0 : index
    %91 = vector.load %arg7[%c6_65, %c0_66] : memref<8x512xf32, #tpu.memory_space<vmem>>, vector<2x512xf32>
    tpu.vector_store %arg7[%c6_65, %c0_66], %90 {strides = array<i32>} : memref<8x512xf32, #tpu.memory_space<vmem>>, vector<2x512xf32>,
    return
  }
  func.func @transform_0(%arg0: i32, %arg1: i32) -> (i32, i32) {
    %c0_i32 = arith.constant 0 : i32
    return %arg0, %arg1 : i32, i32
  }
  func.func @transform_1(%arg0: i32, %arg1: i32) -> (i32, i32) {
    %c0_i32 = arith.constant 0 : i32
    %c0_i32_0 = arith.constant 0 : i32
    %c0_i32_1 = arith.constant 0 : i32
    return %c0_i32, %c0_i32_0 : i32, i32
  }
  func.func @transform_2(%arg0: i32, %arg1: i32) -> (i32, i32) {
    %c0_i32 = arith.constant 0 : i32
    %c0_i32_0 = arith.constant 0 : i32
    %c0_i32_1 = arith.constant 0 : i32
    return %c0_i32, %c0_i32_0 : i32, i32
  }
  func.func @transform_3(%arg0: i32, %arg1: i32) -> (i32, i32) {
    %c0_i32 = arith.constant 0 : i32
    %c0_i32_0 = arith.constant 0 : i32
    %c0_i32_1 = arith.constant 0 : i32
    return %c0_i32, %c0_i32_0 : i32, i32
  }
  func.func @transform_4(%arg0: i32, %arg1: i32) -> (i32, i32, i32) {
    %c0_i32 = arith.constant 0 : i32
    %c0_i32_0 = arith.constant 0 : i32
    %c0_i32_1 = arith.constant 0 : i32
    return %arg0, %c0_i32, %c0_i32_0 : i32, i32, i32
  }
  func.func @transform_5(%arg0: i32, %arg1: i32) -> (i32, i32) {
    %c0_i32 = arith.constant 0 : i32
    return %arg0, %arg1 : i32, i32
  }
}

</mosaic_0001>

<llo_original>
// kernel: flow_forward.1
$region0: #{flow_forward.1}
  #allocation0 [shape = 'u32[]', space=smem, size = 0x4, offset = 0x4, fixed_abs, tag = 'smem constant byte address 0x4 - core index']
  #allocation1 [shape = 'u32[144,128]{1,0:T(1,128)}', space=vmem, size = 0x12000, scoped, tag = 'internal scratch']
  %s0 = inlined_call_operand.vmem [shape: f32[8,512], index: 0, kind: input, shape index: {}]
  %s1 = inlined_call_operand.vmem [shape: f32[32,2], index: 1, kind: input, shape index: {}]
  %s2 = inlined_call_operand.vmem [shape: f32[2,32], index: 2, kind: input, shape index: {}]
  %s3 = inlined_call_operand.vmem [shape: f32[2,1], index: 3, kind: input, shape index: {}]
  %s4 = inlined_call_operand.vmem [shape: f32[1,32,4], index: 4, kind: input, shape index: {}]
  %s5 = inlined_call_operand.vmem [shape: f32[8,512], index: 5, kind: output, shape index: {}]
  %s6 = sld [smem:[#allocation0]]
  $region30: #{flow_forward.1} parent=0
    _
  %s8 = ssub.s32 1, %s6
  %s9 = scalar_select 0, %s8, %s6
  // Predicated region
  $region2: #{flow_forward.1} parent=0 // pred_check
    _
  $region3: #{flow_forward.1} parent=0 // pred_check_branch
    %11 = sbr.rel (0) target = $region5
  $region4: #{flow_forward.1} parent=0 // pred_region
    _
  $region5: #{flow_forward.1} parent=0 // pred_fallthru
    _
  // Predicated region
  $region6: #{flow_forward.1} parent=0 // pred_check
    _
  $region7: #{flow_forward.1} parent=0 // pred_check_branch
    %13 = sbr.rel (0) target = $region9
  $region8: #{flow_forward.1} parent=0 // pred_region
    _
  $region9: #{flow_forward.1} parent=0 // pred_fallthru
    _
  // Predicated region
  $region10: #{flow_forward.1} parent=0 // pred_check
    _
  $region11: #{flow_forward.1} parent=0 // pred_check_branch
    %15 = sbr.rel (0) target = $region13
  $region12: #{flow_forward.1} parent=0 // pred_region
    _
  $region13: #{flow_forward.1} parent=0 // pred_fallthru
    _
  // Predicated region
  $region14: #{flow_forward.1} parent=0 // pred_check
    _
  $region15: #{flow_forward.1} parent=0 // pred_check_branch
    %17 = sbr.rel (0) target = $region17
  $region16: #{flow_forward.1} parent=0 // pred_region
    _
  $region17: #{flow_forward.1} parent=0 // pred_fallthru
    _
  // Predicated region
  $region18: #{flow_forward.1} parent=0 // pred_check
    _
  $region19: #{flow_forward.1} parent=0 // pred_check_branch
    %19 = sbr.rel (0) target = $region21
  $region20: #{flow_forward.1} parent=0 // pred_region
    _
  $region21: #{flow_forward.1} parent=0 // pred_fallthru
    _
  %v20 = vld [vmem:[%s1] sm:$0xff]
  %v21 = vld [vmem:[%s1 + $0x8] sm:$0xff]
  %v22 = vld [vmem:[%s1 + $0x10] sm:$0xff]
  %v23 = vld [vmem:[%s1 + $0x18] sm:$0xff]
  %v24 = vld [vmem:[%s0] ss:$8 sm:$0xf]
  %26 = vset.pattern.permute.xlu0 0
  %27 = vperm.xlu0 %26, %v20
  %v28 = vpop.permute.xlu0 %27
  %31 = vset.pattern.permute.xlu0 0
  %32 = vperm.xlu0 %31, %v21
  %v33 = vpop.permute.xlu0 %32
  %36 = vset.pattern.permute.xlu0 0
  %37 = vperm.xlu0 %36, %v22
  %v38 = vpop.permute.xlu0 %37
  %41 = vset.pattern.permute.xlu0 0
  %42 = vperm.xlu0 %41, %v23
  %v43 = vpop.permute.xlu0 %42
  %v46 = vlaneseq
  %v47 = vshrl.u32 %v46, 7
  %v48 = vsub.s32 0, %v47
  %v49 = vrot.slane %v24, %v48
  %v50 = vlaneseq
  %v51 = vshrl.u32 %v50, 7
  %v52 = vsub.s32 1, %v51
  %v53 = vrot.slane %v24, %v52
  %v54 = vlaneseq
  %v55 = vshrl.u32 %v54, 7
  %v56 = vsub.s32 2, %v55
  %v57 = vrot.slane %v24, %v56
  %v58 = vlaneseq
  %v59 = vshrl.u32 %v58, 7
  %v60 = vsub.s32 3, %v59
  %v61 = vrot.slane %v24, %v60
  %v66 = vmul.f32 %v28, %v49
  %v67 = vmul.f32 %v28, %v53
  %v68 = vmul.f32 %v28, %v57
  %v69 = vmul.f32 %v28, %v61
  %v70 = vmul.f32 %v33, %v49
  %v71 = vmul.f32 %v33, %v53
  %v72 = vmul.f32 %v33, %v57
  %v73 = vmul.f32 %v33, %v61
  %v74 = vmul.f32 %v38, %v49
  %v75 = vmul.f32 %v38, %v53
  %v76 = vmul.f32 %v38, %v57
  %v77 = vmul.f32 %v38, %v61
  %v78 = vmul.f32 %v43, %v49
  %v79 = vmul.f32 %v43, %v53
  %v80 = vmul.f32 %v43, %v57
  %v81 = vmul.f32 %v43, %v61
  %s82 = scalar_lea.vmem %s0, 1
  %v83 = vld [vmem:[%s82] ss:$8 sm:$0xf]
  %84 = vset.pattern.permute.xlu0 1
  %85 = vperm.xlu0 %84, %v20
  %v86 = vpop.permute.xlu0 %85
  %88 = vset.pattern.permute.xlu0 1
  %89 = vperm.xlu0 %88, %v21
  %v90 = vpop.permute.xlu0 %89
  %92 = vset.pattern.permute.xlu0 1
  %93 = vperm.xlu0 %92, %v22
  %v94 = vpop.permute.xlu0 %93
  %96 = vset.pattern.permute.xlu0 1
  %97 = vperm.xlu0 %96, %v23
  %v98 = vpop.permute.xlu0 %97
  %v101 = vlaneseq
  %v102 = vshrl.u32 %v101, 7
  %v103 = vsub.s32 0, %v102
  %v104 = vrot.slane %v83, %v103
  %v105 = vlaneseq
  %v106 = vshrl.u32 %v105, 7
  %v107 = vsub.s32 1, %v106
  %v108 = vrot.slane %v83, %v107
  %v109 = vlaneseq
  %v110 = vshrl.u32 %v109, 7
  %v111 = vsub.s32 2, %v110
  %v112 = vrot.slane %v83, %v111
  %v113 = vlaneseq
  %v114 = vshrl.u32 %v113, 7
  %v115 = vsub.s32 3, %v114
  %v116 = vrot.slane %v83, %v115
  %v121 = vmul.f32 %v86, %v104
  %v122 = vmul.f32 %v86, %v108
  %v123 = vmul.f32 %v86, %v112
  %v124 = vmul.f32 %v86, %v116
  %v125 = vmul.f32 %v90, %v104
  %v126 = vmul.f32 %v90, %v108
  %v127 = vmul.f32 %v90, %v112
  %v128 = vmul.f32 %v90, %v116
  %v129 = vmul.f32 %v94, %v104
  %v130 = vmul.f32 %v94, %v108
  %v131 = vmul.f32 %v94, %v112
  %v132 = vmul.f32 %v94, %v116
  %v133 = vmul.f32 %v98, %v104
  %v134 = vmul.f32 %v98, %v108
  %v135 = vmul.f32 %v98, %v112
  %v136 = vmul.f32 %v98, %v116
  %v137 = vadd.f32 %v66, %v121
  %v138 = vadd.f32 %v67, %v122
  %v139 = vadd.f32 %v68, %v123
  %v140 = vadd.f32 %v69, %v124
  %v141 = vadd.f32 %v70, %v125
  %v142 = vadd.f32 %v71, %v126
  %v143 = vadd.f32 %v72, %v127
  %v144 = vadd.f32 %v73, %v128
  %v145 = vadd.f32 %v74, %v129
  %v146 = vadd.f32 %v75, %v130
  %v147 = vadd.f32 %v76, %v131
  %v148 = vadd.f32 %v77, %v132
  %v149 = vadd.f32 %v78, %v133
  %v150 = vadd.f32 %v79, %v134
  %v151 = vadd.f32 %v80, %v135
  %v152 = vadd.f32 %v81, %v136
  %v153 = vld [vmem:[%s4] sm:$0xff]
  %v154 = vld [vmem:[%s4 + $0x8] sm:$0xff]
  %v155 = vld [vmem:[%s4 + $0x10] sm:$0xff]
  %v156 = vld [vmem:[%s4 + $0x18] sm:$0xff]
  %158 = vset.pattern.permute.xlu0 0
  %159 = vperm.xlu0 %158, %v153
  %v160 = vpop.permute.xlu0 %159
  %163 = vset.pattern.permute.xlu0 0
  %164 = vperm.xlu0 %163, %v154
  %v165 = vpop.permute.xlu0 %164
  %168 = vset.pattern.permute.xlu0 0
  %169 = vperm.xlu0 %168, %v155
  %v170 = vpop.permute.xlu0 %169
  %173 = vset.pattern.permute.xlu0 0
  %174 = vperm.xlu0 %173, %v156
  %v175 = vpop.permute.xlu0 %174
  %v177 = vadd.f32 %v137, %v160
  %v178 = vadd.f32 %v138, %v160
  %v179 = vadd.f32 %v139, %v160
  %v180 = vadd.f32 %v140, %v160
  %v181 = vadd.f32 %v141, %v165
  %v182 = vadd.f32 %v142, %v165
  %v183 = vadd.f32 %v143, %v165
  %v184 = vadd.f32 %v144, %v165
  %v185 = vadd.f32 %v145, %v170
  %v186 = vadd.f32 %v146, %v170
  %v187 = vadd.f32 %v147, %v170
  %v188 = vadd.f32 %v148, %v170
  %v189 = vadd.f32 %v149, %v175
  %v190 = vadd.f32 %v150, %v175
  %v191 = vadd.f32 %v151, %v175
  %v192 = vadd.f32 %v152, %v175
  %v193 = vmax.f32 %v177, 0.0
  %v194 = vmax.f32 %v178, 0.0
  %v195 = vmax.f32 %v179, 0.0
  %v196 = vmax.f32 %v180, 0.0
  %v197 = vmax.f32 %v181, 0.0
  %v198 = vmax.f32 %v182, 0.0
  %v199 = vmax.f32 %v183, 0.0
  %v200 = vmax.f32 %v184, 0.0
  %v201 = vmax.f32 %v185, 0.0
  %v202 = vmax.f32 %v186, 0.0
  %v203 = vmax.f32 %v187, 0.0
  %v204 = vmax.f32 %v188, 0.0
  %v205 = vmax.f32 %v189, 0.0
  %v206 = vmax.f32 %v190, 0.0
  %v207 = vmax.f32 %v191, 0.0
  %v208 = vmax.f32 %v192, 0.0
  %v209 = vld [vmem:[%s2] sm:$0x3]
  %v210 = vld [vmem:[%s3] sm:$0x3]
  %212 = vset.pattern.permute.xlu0 0
  %213 = vperm.xlu0 %212, %v210
  %v214 = vpop.permute.xlu0 %213
  %vm216 = vcmask 261120
  %v218 = vsel %vm216, %v209, 0
  %220 = vmatprep.subr.mxu0 0.0
  %221 = vmatpush1.msra.mxu0 0.0
  %222 = vmatprep.subr.mxu0 0.0
  %223 = vmatpush1.msra.mxu0 0.0
  %224 = vmatprep.subr.mxu0 0.0
  %225 = vmatpush1.msra.mxu0 0.0
  %226 = vmatprep.subr.mxu0 0.0
  %227 = vmatpush1.msra.mxu0 0.0
  %228 = vmatprep.subr.mxu0 0.0
  %229 = vmatpush1.msra.mxu0 0.0
  %230 = vmatprep.subr.mxu0 0.0
  %231 = vmatpush1.msra.mxu0 0.0
  %232 = vmatprep.subr.mxu0 0.0
  %233 = vmatpush1.msra.mxu0 0.0
  %234 = vmatprep.subr.mxu0 0.0
  %235 = vmatpush1.msra.mxu0 0.0
  %236 = vmatprep.subr.mxu0 0.0
  %237 = vmatpush1.msra.mxu0 0.0
  %238 = vmatprep.subr.mxu0 0.0
  %239 = vmatpush1.msra.mxu0 0.0
  %240 = vmatprep.subr.mxu0 0.0
  %241 = vmatpush1.msra.mxu0 0.0
  %242 = vmatprep.subr.mxu0 0.0
  %243 = vmatpush1.msra.mxu0 0.0
  %244 = vmatprep.subr.mxu0 %v206
  %245 = vmatpush1.msra.mxu0 %v205
  %246 = vmatprep.subr.mxu0 %v202
  %247 = vmatpush1.msra.mxu0 %v201
  %248 = vmatprep.subr.mxu0 %v198
  %249 = vmatpush1.msra.mxu0 %v197
  %250 = vmatprep.subr.mxu0 %v194
  %251 = vmatpush1.msra.mxu0 %v193
  %252 = vmatprep.subr.mxu0 0.0
  %253 = vmatpush2.msra.mxu0 0.0
  %254 = vmatprep.subr.mxu0 0.0
  %255 = vmatpush2.msra.mxu0 0.0
  %256 = vmatprep.subr.mxu0 0.0
  %257 = vmatpush2.msra.mxu0 0.0
  %258 = vmatprep.subr.mxu0 0.0
  %259 = vmatpush2.msra.mxu0 0.0
  %260 = vmatprep.subr.mxu0 0.0
  %261 = vmatpush2.msra.mxu0 0.0
  %262 = vmatprep.subr.mxu0 0.0
  %263 = vmatpush2.msra.mxu0 0.0
  %264 = vmatprep.subr.mxu0 0.0
  %265 = vmatpush2.msra.mxu0 0.0
  %266 = vmatprep.subr.mxu0 0.0
  %267 = vmatpush2.msra.mxu0 0.0
  %268 = vmatprep.subr.mxu0 0.0
  %269 = vmatpush2.msra.mxu0 0.0
  %270 = vmatprep.subr.mxu0 0.0
  %271 = vmatpush2.msra.mxu0 0.0
  %272 = vmatprep.subr.mxu0 0.0
  %273 = vmatpush2.msra.mxu0 0.0
  %274 = vmatprep.subr.mxu0 0.0
  %275 = vmatpush2.msra.mxu0 0.0
  %276 = vmatprep.subr.mxu0 0.0
  %277 = vmatpush2.msra.mxu0 0.0
  %278 = vmatprep.subr.mxu0 0.0
  %279 = vmatpush2.msra.mxu0 0.0
  %280 = vmatprep.subr.mxu0 0.0
  %281 = vmatpush2.msra.mxu0 0.0
  %282 = vmatprep.subr.mxu0 0.0
  %283 = vmatpush2.msra.mxu0 0.0
  %284 = vmatprep.mubr.f32.mxu0 0.0
  %285 = vmatmul.mubr.f32.gmra.mxu0 %v218
  %v286 = vpop.f32.mrf.mxu0
  %v287 = vadd.f32 %v214, %v286
  %v288 = vpop.f32.mrf.mxu0
  %v289 = vadd.f32 %v214, %v288
  %290 = vdwg.mxu0
  %291 = vmatprep.subr.mxu0 0.0
  %292 = vmatpush1.msra.mxu0 0.0
  %293 = vmatprep.subr.mxu0 0.0
  %294 = vmatpush1.msra.mxu0 0.0
  %295 = vmatprep.subr.mxu0 0.0
  %296 = vmatpush1.msra.mxu0 0.0
  %297 = vmatprep.subr.mxu0 0.0
  %298 = vmatpush1.msra.mxu0 0.0
  %299 = vmatprep.subr.mxu0 0.0
  %300 = vmatpush1.msra.mxu0 0.0
  %301 = vmatprep.subr.mxu0 0.0
  %302 = vmatpush1.msra.mxu0 0.0
  %303 = vmatprep.subr.mxu0 0.0
  %304 = vmatpush1.msra.mxu0 0.0
  %305 = vmatprep.subr.mxu0 0.0
  %306 = vmatpush1.msra.mxu0 0.0
  %307 = vmatprep.subr.mxu0 0.0
  %308 = vmatpush1.msra.mxu0 0.0
  %309 = vmatprep.subr.mxu0 0.0
  %310 = vmatpush1.msra.mxu0 0.0
  %311 = vmatprep.subr.mxu0 0.0
  %312 = vmatpush1.msra.mxu0 0.0
  %313 = vmatprep.subr.mxu0 0.0
  %314 = vmatpush1.msra.mxu0 0.0
  %315 = vmatprep.subr.mxu0 %v208
  %316 = vmatpush1.msra.mxu0 %v207
  %317 = vmatprep.subr.mxu0 %v204
  %318 = vmatpush1.msra.mxu0 %v203
  %319 = vmatprep.subr.mxu0 %v200
  %320 = vmatpush1.msra.mxu0 %v199
  %321 = vmatprep.subr.mxu0 %v196
  %322 = vmatpush1.msra.mxu0 %v195
  %323 = vmatprep.subr.mxu0 0.0
  %324 = vmatpush2.msra.mxu0 0.0
  %325 = vmatprep.subr.mxu0 0.0
  %326 = vmatpush2.msra.mxu0 0.0
  %327 = vmatprep.subr.mxu0 0.0
  %328 = vmatpush2.msra.mxu0 0.0
  %329 = vmatprep.subr.mxu0 0.0
  %330 = vmatpush2.msra.mxu0 0.0
  %331 = vmatprep.subr.mxu0 0.0
  %332 = vmatpush2.msra.mxu0 0.0
  %333 = vmatprep.subr.mxu0 0.0
  %334 = vmatpush2.msra.mxu0 0.0
  %335 = vmatprep.subr.mxu0 0.0
  %336 = vmatpush2.msra.mxu0 0.0
  %337 = vmatprep.subr.mxu0 0.0
  %338 = vmatpush2.msra.mxu0 0.0
  %339 = vmatprep.subr.mxu0 0.0
  %340 = vmatpush2.msra.mxu0 0.0
  %341 = vmatprep.subr.mxu0 0.0
  %342 = vmatpush2.msra.mxu0 0.0
  %343 = vmatprep.subr.mxu0 0.0
  %344 = vmatpush2.msra.mxu0 0.0
  %345 = vmatprep.subr.mxu0 0.0
  %346 = vmatpush2.msra.mxu0 0.0
  %347 = vmatprep.subr.mxu0 0.0
  %348 = vmatpush2.msra.mxu0 0.0
  %349 = vmatprep.subr.mxu0 0.0
  %350 = vmatpush2.msra.mxu0 0.0
  %351 = vmatprep.subr.mxu0 0.0
  %352 = vmatpush2.msra.mxu0 0.0
  %353 = vmatprep.subr.mxu0 0.0
  %354 = vmatpush2.msra.mxu0 0.0
  %355 = vmatprep.mubr.f32.mxu0 0.0
  %356 = vmatmul.mubr.f32.gmra.mxu0 %v218
  %v357 = vpop.f32.mrf.mxu0
  %v358 = vadd.f32 %v214, %v357
  %v359 = vpop.f32.mrf.mxu0
  %v360 = vadd.f32 %v214, %v359
  %361 = vdwg.mxu0
  %362 = vst [vmem:[%s5] sm:$0x3] %v287
  %363 = vst [vmem:[%s5 + $0x8] sm:$0x3] %v289
  %364 = vst [vmem:[%s5 + $0x10] sm:$0x3] %v358
  %365 = vst [vmem:[%s5 + $0x18] sm:$0x3] %v360
  %v366 = vld [vmem:[%s1] sm:$0xff]
  %v367 = vld [vmem:[%s1 + $0x8] sm:$0xff]
  %v368 = vld [vmem:[%s1 + $0x10] sm:$0xff]
  %v369 = vld [vmem:[%s1 + $0x18] sm:$0xff]
  %s370 = scalar_lea.vmem %s0, 2
  %v371 = vld [vmem:[%s370] ss:$8 sm:$0xf]
  %373 = vset.pattern.permute.xlu0 0
  %374 = vperm.xlu0 %373, %v366
  %v375 = vpop.permute.xlu0 %374
  %378 = vset.pattern.permute.xlu0 0
  %379 = vperm.xlu0 %378, %v367
  %v380 = vpop.permute.xlu0 %379
  %383 = vset.pattern.permute.xlu0 0
  %384 = vperm.xlu0 %383, %v368
  %v385 = vpop.permute.xlu0 %384
  %388 = vset.pattern.permute.xlu0 0
  %389 = vperm.xlu0 %388, %v369
  %v390 = vpop.permute.xlu0 %389
  %v393 = vlaneseq
  %v394 = vshrl.u32 %v393, 7
  %v395 = vsub.s32 0, %v394
  %v396 = vrot.slane %v371, %v395
  %v397 = vlaneseq
  %v398 = vshrl.u32 %v397, 7
  %v399 = vsub.s32 1, %v398
  %v400 = vrot.slane %v371, %v399
  %v401 = vlaneseq
  %v402 = vshrl.u32 %v401, 7
  %v403 = vsub.s32 2, %v402
  %v404 = vrot.slane %v371, %v403
  %v405 = vlaneseq
  %v406 = vshrl.u32 %v405, 7
  %v407 = vsub.s32 3, %v406
  %v408 = vrot.slane %v371, %v407
  %v413 = vmul.f32 %v375, %v396
  %v414 = vmul.f32 %v375, %v400
  %v415 = vmul.f32 %v375, %v404
  %v416 = vmul.f32 %v375, %v408
  %v417 = vmul.f32 %v380, %v396
  %v418 = vmul.f32 %v380, %v400
  %v419 = vmul.f32 %v380, %v404
  %v420 = vmul.f32 %v380, %v408
  %v421 = vmul.f32 %v385, %v396
  %v422 = vmul.f32 %v385, %v400
  %v423 = vmul.f32 %v385, %v404
  %v424 = vmul.f32 %v385, %v408
  %v425 = vmul.f32 %v390, %v396
  %v426 = vmul.f32 %v390, %v400
  %v427 = vmul.f32 %v390, %v404
  %v428 = vmul.f32 %v390, %v408
  %s429 = scalar_lea.vmem %s0, 3
  %v430 = vld [vmem:[%s429] ss:$8 sm:$0xf]
  %431 = vset.pattern.permute.xlu0 1
  %432 = vperm.xlu0 %431, %v366
  %v433 = vpop.permute.xlu0 %432
  %435 = vset.pattern.permute.xlu0 1
  %436 = vperm.xlu0 %435, %v367
  %v437 = vpop.permute.xlu0 %436
  %439 = vset.pattern.permute.xlu0 1
  %440 = vperm.xlu0 %439, %v368
  %v441 = vpop.permute.xlu0 %440
  %443 = vset.pattern.permute.xlu0 1
  %444 = vperm.xlu0 %443, %v369
  %v445 = vpop.permute.xlu0 %444
  %v448 = vlaneseq
  %v449 = vshrl.u32 %v448, 7
  %v450 = vsub.s32 0, %v449
  %v451 = vrot.slane %v430, %v450
  %v452 = vlaneseq
  %v453 = vshrl.u32 %v452, 7
  %v454 = vsub.s32 1, %v453
  %v455 = vrot.slane %v430, %v454
  %v456 = vlaneseq
  %v457 = vshrl.u32 %v456, 7
  %v458 = vsub.s32 2, %v457
  %v459 = vrot.slane %v430, %v458
  %v460 = vlaneseq
  %v461 = vshrl.u32 %v460, 7
  %v462 = vsub.s32 3, %v461
  %v463 = vrot.slane %v430, %v462
  %v468 = vmul.f32 %v433, %v451
  %v469 = vmul.f32 %v433, %v455
  %v470 = vmul.f32 %v433, %v459
  %v471 = vmul.f32 %v433, %v463
  %v472 = vmul.f32 %v437, %v451
  %v473 = vmul.f32 %v437, %v455
  %v474 = vmul.f32 %v437, %v459
  %v475 = vmul.f32 %v437, %v463
  %v476 = vmul.f32 %v441, %v451
  %v477 = vmul.f32 %v441, %v455
  %v478 = vmul.f32 %v441, %v459
  %v479 = vmul.f32 %v441, %v463
  %v480 = vmul.f32 %v445, %v451
  %v481 = vmul.f32 %v445, %v455
  %v482 = vmul.f32 %v445, %v459
  %v483 = vmul.f32 %v445, %v463
  %v484 = vadd.f32 %v413, %v468
  %v485 = vadd.f32 %v414, %v469
  %v486 = vadd.f32 %v415, %v470
  %v487 = vadd.f32 %v416, %v471
  %v488 = vadd.f32 %v417, %v472
  %v489 = vadd.f32 %v418, %v473
  %v490 = vadd.f32 %v419, %v474
  %v491 = vadd.f32 %v420, %v475
  %v492 = vadd.f32 %v421, %v476
  %v493 = vadd.f32 %v422, %v477
  %v494 = vadd.f32 %v423, %v478
  %v495 = vadd.f32 %v424, %v479
  %v496 = vadd.f32 %v425, %v480
  %v497 = vadd.f32 %v426, %v481
  %v498 = vadd.f32 %v427, %v482
  %v499 = vadd.f32 %v428, %v483
  %v500 = vld [vmem:[%s4] sm:$0xff]
  %v501 = vld [vmem:[%s4 + $0x8] sm:$0xff]
  %v502 = vld [vmem:[%s4 + $0x10] sm:$0xff]
  %v503 = vld [vmem:[%s4 + $0x18] sm:$0xff]
  %505 = vset.pattern.permute.xlu0 1
  %506 = vperm.xlu0 %505, %v500
  %v507 = vpop.permute.xlu0 %506
  %510 = vset.pattern.permute.xlu0 1
  %511 = vperm.xlu0 %510, %v501
  %v512 = vpop.permute.xlu0 %511
  %515 = vset.pattern.permute.xlu0 1
  %516 = vperm.xlu0 %515, %v502
  %v517 = vpop.permute.xlu0 %516
  %520 = vset.pattern.permute.xlu0 1
  %521 = vperm.xlu0 %520, %v503
  %v522 = vpop.permute.xlu0 %521
  %v524 = vadd.f32 %v484, %v507
  %v525 = vadd.f32 %v485, %v507
  %v526 = vadd.f32 %v486, %v507
  %v527 = vadd.f32 %v487, %v507
  %v528 = vadd.f32 %v488, %v512
  %v529 = vadd.f32 %v489, %v512
  %v530 = vadd.f32 %v490, %v512
  %v531 = vadd.f32 %v491, %v512
  %v532 = vadd.f32 %v492, %v517
  %v533 = vadd.f32 %v493, %v517
  %v534 = vadd.f32 %v494, %v517
  %v535 = vadd.f32 %v495, %v517
  %v536 = vadd.f32 %v496, %v522
  %v537 = vadd.f32 %v497, %v522
  %v538 = vadd.f32 %v498, %v522
  %v539 = vadd.f32 %v499, %v522
  %v540 = vmax.f32 %v524, 0.0
  %v541 = vmax.f32 %v525, 0.0
  %v542 = vmax.f32 %v526, 0.0
  %v543 = vmax.f32 %v527, 0.0
  %v544 = vmax.f32 %v528, 0.0
  %v545 = vmax.f32 %v529, 0.0
  %v546 = vmax.f32 %v530, 0.0
  %v547 = vmax.f32 %v531, 0.0
  %v548 = vmax.f32 %v532, 0.0
  %v549 = vmax.f32 %v533, 0.0
  %v550 = vmax.f32 %v534, 0.0
  %v551 = vmax.f32 %v535, 0.0
  %v552 = vmax.f32 %v536, 0.0
  %v553 = vmax.f32 %v537, 0.0
  %v554 = vmax.f32 %v538, 0.0
  %v555 = vmax.f32 %v539, 0.0
  %v556 = vld [vmem:[%s2] sm:$0x3]
  %v557 = vld [vmem:[%s3] sm:$0x3]
  %559 = vset.pattern.permute.xlu0 0
  %560 = vperm.xlu0 %559, %v557
  %v561 = vpop.permute.xlu0 %560
  %v564 = vsel %vm216, %v556, 0
  %566 = vmatprep.subr.mxu0 0.0
  %567 = vmatpush1.msra.mxu0 0.0
  %568 = vmatprep.subr.mxu0 0.0
  %569 = vmatpush1.msra.mxu0 0.0
  %570 = vmatprep.subr.mxu0 0.0
  %571 = vmatpush1.msra.mxu0 0.0
  %572 = vmatprep.subr.mxu0 0.0
  %573 = vmatpush1.msra.mxu0 0.0
  %574 = vmatprep.subr.mxu0 0.0
  %575 = vmatpush1.msra.mxu0 0.0
  %576 = vmatprep.subr.mxu0 0.0
  %577 = vmatpush1.msra.mxu0 0.0
  %578 = vmatprep.subr.mxu0 0.0
  %579 = vmatpush1.msra.mxu0 0.0
  %580 = vmatprep.subr.mxu0 0.0
  %581 = vmatpush1.msra.mxu0 0.0
  %582 = vmatprep.subr.mxu0 0.0
  %583 = vmatpush1.msra.mxu0 0.0
  %584 = vmatprep.subr.mxu0 0.0
  %585 = vmatpush1.msra.mxu0 0.0
  %586 = vmatprep.subr.mxu0 0.0
  %587 = vmatpush1.msra.mxu0 0.0
  %588 = vmatprep.subr.mxu0 0.0
  %589 = vmatpush1.msra.mxu0 0.0
  %590 = vmatprep.subr.mxu0 %v553
  %591 = vmatpush1.msra.mxu0 %v552
  %592 = vmatprep.subr.mxu0 %v549
  %593 = vmatpush1.msra.mxu0 %v548
  %594 = vmatprep.subr.mxu0 %v545
  %595 = vmatpush1.msra.mxu0 %v544
  %596 = vmatprep.subr.mxu0 %v541
  %597 = vmatpush1.msra.mxu0 %v540
  %598 = vmatprep.subr.mxu0 0.0
  %599 = vmatpush2.msra.mxu0 0.0
  %600 = vmatprep.subr.mxu0 0.0
  %601 = vmatpush2.msra.mxu0 0.0
  %602 = vmatprep.subr.mxu0 0.0
  %603 = vmatpush2.msra.mxu0 0.0
  %604 = vmatprep.subr.mxu0 0.0
  %605 = vmatpush2.msra.mxu0 0.0
  %606 = vmatprep.subr.mxu0 0.0
  %607 = vmatpush2.msra.mxu0 0.0
  %608 = vmatprep.subr.mxu0 0.0
  %609 = vmatpush2.msra.mxu0 0.0
  %610 = vmatprep.subr.mxu0 0.0
  %611 = vmatpush2.msra.mxu0 0.0
  %612 = vmatprep.subr.mxu0 0.0
  %613 = vmatpush2.msra.mxu0 0.0
  %614 = vmatprep.subr.mxu0 0.0
  %615 = vmatpush2.msra.mxu0 0.0
  %616 = vmatprep.subr.mxu0 0.0
  %617 = vmatpush2.msra.mxu0 0.0
  %618 = vmatprep.subr.mxu0 0.0
  %619 = vmatpush2.msra.mxu0 0.0
  %620 = vmatprep.subr.mxu0 0.0
  %621 = vmatpush2.msra.mxu0 0.0
  %622 = vmatprep.subr.mxu0 0.0
  %623 = vmatpush2.msra.mxu0 0.0
  %624 = vmatprep.subr.mxu0 0.0
  %625 = vmatpush2.msra.mxu0 0.0
  %626 = vmatprep.subr.mxu0 0.0
  %627 = vmatpush2.msra.mxu0 0.0
  %628 = vmatprep.subr.mxu0 0.0
  %629 = vmatpush2.msra.mxu0 0.0
  %630 = vmatprep.mubr.f32.mxu0 0.0
  %631 = vmatmul.mubr.f32.gmra.mxu0 %v564
  %v632 = vpop.f32.mrf.mxu0
  %v633 = vadd.f32 %v561, %v632
  %v634 = vpop.f32.mrf.mxu0
  %v635 = vadd.f32 %v561, %v634
  %636 = vdwg.mxu0
  %637 = vmatprep.subr.mxu0 0.0
  %638 = vmatpush1.msra.mxu0 0.0
  %639 = vmatprep.subr.mxu0 0.0
  %640 = vmatpush1.msra.mxu0 0.0
  %641 = vmatprep.subr.mxu0 0.0
  %642 = vmatpush1.msra.mxu0 0.0
  %643 = vmatprep.subr.mxu0 0.0
  %644 = vmatpush1.msra.mxu0 0.0
  %645 = vmatprep.subr.mxu0 0.0
  %646 = vmatpush1.msra.mxu0 0.0
  %647 = vmatprep.subr.mxu0 0.0
  %648 = vmatpush1.msra.mxu0 0.0
  %649 = vmatprep.subr.mxu0 0.0
  %650 = vmatpush1.msra.mxu0 0.0
  %651 = vmatprep.subr.mxu0 0.0
  %652 = vmatpush1.msra.mxu0 0.0
  %653 = vmatprep.subr.mxu0 0.0
  %654 = vmatpush1.msra.mxu0 0.0
  %655 = vmatprep.subr.mxu0 0.0
  %656 = vmatpush1.msra.mxu0 0.0
  %657 = vmatprep.subr.mxu0 0.0
  %658 = vmatpush1.msra.mxu0 0.0
  %659 = vmatprep.subr.mxu0 0.0
  %660 = vmatpush1.msra.mxu0 0.0
  %661 = vmatprep.subr.mxu0 %v555
  %662 = vmatpush1.msra.mxu0 %v554
  %663 = vmatprep.subr.mxu0 %v551
  %664 = vmatpush1.msra.mxu0 %v550
  %665 = vmatprep.subr.mxu0 %v547
  %666 = vmatpush1.msra.mxu0 %v546
  %667 = vmatprep.subr.mxu0 %v543
  %668 = vmatpush1.msra.mxu0 %v542
  %669 = vmatprep.subr.mxu0 0.0
  %670 = vmatpush2.msra.mxu0 0.0
  %671 = vmatprep.subr.mxu0 0.0
  %672 = vmatpush2.msra.mxu0 0.0
  %673 = vmatprep.subr.mxu0 0.0
  %674 = vmatpush2.msra.mxu0 0.0
  %675 = vmatprep.subr.mxu0 0.0
  %676 = vmatpush2.msra.mxu0 0.0
  %677 = vmatprep.subr.mxu0 0.0
  %678 = vmatpush2.msra.mxu0 0.0
  %679 = vmatprep.subr.mxu0 0.0
  %680 = vmatpush2.msra.mxu0 0.0
  %681 = vmatprep.subr.mxu0 0.0
  %682 = vmatpush2.msra.mxu0 0.0
  %683 = vmatprep.subr.mxu0 0.0
  %684 = vmatpush2.msra.mxu0 0.0
  %685 = vmatprep.subr.mxu0 0.0
  %686 = vmatpush2.msra.mxu0 0.0
  %687 = vmatprep.subr.mxu0 0.0
  %688 = vmatpush2.msra.mxu0 0.0
  %689 = vmatprep.subr.mxu0 0.0
  %690 = vmatpush2.msra.mxu0 0.0
  %691 = vmatprep.subr.mxu0 0.0
  %692 = vmatpush2.msra.mxu0 0.0
  %693 = vmatprep.subr.mxu0 0.0
  %694 = vmatpush2.msra.mxu0 0.0
  %695 = vmatprep.subr.mxu0 0.0
  %696 = vmatpush2.msra.mxu0 0.0
  %697 = vmatprep.subr.mxu0 0.0
  %698 = vmatpush2.msra.mxu0 0.0
  %699 = vmatprep.subr.mxu0 0.0
  %700 = vmatpush2.msra.mxu0 0.0
  %701 = vmatprep.mubr.f32.mxu0 0.0
  %702 = vmatmul.mubr.f32.gmra.mxu0 %v564
  %v703 = vpop.f32.mrf.mxu0
  %v704 = vadd.f32 %v561, %v703
  %v705 = vpop.f32.mrf.mxu0
  %v706 = vadd.f32 %v561, %v705
  %707 = vdwg.mxu0
  %v712 = vrot.slane %v633, 6
  %v713 = vrot.slane %v635, 6
  %v714 = vrot.slane %v704, 6
  %v715 = vrot.slane %v706, 6
  %720 = vst [vmem:[%s5] sm:$0xc] %v712
  %721 = vst [vmem:[%s5 + $0x8] sm:$0xc] %v713
  %722 = vst [vmem:[%s5 + $0x10] sm:$0xc] %v714
  %723 = vst [vmem:[%s5 + $0x18] sm:$0xc] %v715
  %v724 = vld [vmem:[%s1] sm:$0xff]
  %v725 = vld [vmem:[%s1 + $0x8] sm:$0xff]
  %v726 = vld [vmem:[%s1 + $0x10] sm:$0xff]
  %v727 = vld [vmem:[%s1 + $0x18] sm:$0xff]
  %s728 = scalar_lea.vmem %s0, 4
  %v729 = vld [vmem:[%s728] ss:$8 sm:$0xf]
  %731 = vset.pattern.permute.xlu0 0
  %732 = vperm.xlu0 %731, %v724
  %v733 = vpop.permute.xlu0 %732
  %736 = vset.pattern.permute.xlu0 0
  %737 = vperm.xlu0 %736, %v725
  %v738 = vpop.permute.xlu0 %737
  %741 = vset.pattern.permute.xlu0 0
  %742 = vperm.xlu0 %741, %v726
  %v743 = vpop.permute.xlu0 %742
  %746 = vset.pattern.permute.xlu0 0
  %747 = vperm.xlu0 %746, %v727
  %v748 = vpop.permute.xlu0 %747
  %v751 = vlaneseq
  %v752 = vshrl.u32 %v751, 7
  %v753 = vsub.s32 0, %v752
  %v754 = vrot.slane %v729, %v753
  %v755 = vlaneseq
  %v756 = vshrl.u32 %v755, 7
  %v757 = vsub.s32 1, %v756
  %v758 = vrot.slane %v729, %v757
  %v759 = vlaneseq
  %v760 = vshrl.u32 %v759, 7
  %v761 = vsub.s32 2, %v760
  %v762 = vrot.slane %v729, %v761
  %v763 = vlaneseq
  %v764 = vshrl.u32 %v763, 7
  %v765 = vsub.s32 3, %v764
  %v766 = vrot.slane %v729, %v765
  %v771 = vmul.f32 %v733, %v754
  %v772 = vmul.f32 %v733, %v758
  %v773 = vmul.f32 %v733, %v762
  %v774 = vmul.f32 %v733, %v766
  %v775 = vmul.f32 %v738, %v754
  %v776 = vmul.f32 %v738, %v758
  %v777 = vmul.f32 %v738, %v762
  %v778 = vmul.f32 %v738, %v766
  %v779 = vmul.f32 %v743, %v754
  %v780 = vmul.f32 %v743, %v758
  %v781 = vmul.f32 %v743, %v762
  %v782 = vmul.f32 %v743, %v766
  %v783 = vmul.f32 %v748, %v754
  %v784 = vmul.f32 %v748, %v758
  %v785 = vmul.f32 %v748, %v762
  %v786 = vmul.f32 %v748, %v766
  %s787 = scalar_lea.vmem %s0, 5
  %v788 = vld [vmem:[%s787] ss:$8 sm:$0xf]
  %789 = vset.pattern.permute.xlu0 1
  %790 = vperm.xlu0 %789, %v724
  %v791 = vpop.permute.xlu0 %790
  %793 = vset.pattern.permute.xlu0 1
  %794 = vperm.xlu0 %793, %v725
  %v795 = vpop.permute.xlu0 %794
  %797 = vset.pattern.permute.xlu0 1
  %798 = vperm.xlu0 %797, %v726
  %v799 = vpop.permute.xlu0 %798
  %801 = vset.pattern.permute.xlu0 1
  %802 = vperm.xlu0 %801, %v727
  %v803 = vpop.permute.xlu0 %802
  %v806 = vlaneseq
  %v807 = vshrl.u32 %v806, 7
  %v808 = vsub.s32 0, %v807
  %v809 = vrot.slane %v788, %v808
  %v810 = vlaneseq
  %v811 = vshrl.u32 %v810, 7
  %v812 = vsub.s32 1, %v811
  %v813 = vrot.slane %v788, %v812
  %v814 = vlaneseq
  %v815 = vshrl.u32 %v814, 7
  %v816 = vsub.s32 2, %v815
  %v817 = vrot.slane %v788, %v816
  %v818 = vlaneseq
  %v819 = vshrl.u32 %v818, 7
  %v820 = vsub.s32 3, %v819
  %v821 = vrot.slane %v788, %v820
  %v826 = vmul.f32 %v791, %v809
  %v827 = vmul.f32 %v791, %v813
  %v828 = vmul.f32 %v791, %v817
  %v829 = vmul.f32 %v791, %v821
  %v830 = vmul.f32 %v795, %v809
  %v831 = vmul.f32 %v795, %v813
  %v832 = vmul.f32 %v795, %v817
  %v833 = vmul.f32 %v795, %v821
  %v834 = vmul.f32 %v799, %v809
  %v835 = vmul.f32 %v799, %v813
  %v836 = vmul.f32 %v799, %v817
  %v837 = vmul.f32 %v799, %v821
  %v838 = vmul.f32 %v803, %v809
  %v839 = vmul.f32 %v803, %v813
  %v840 = vmul.f32 %v803, %v817
  %v841 = vmul.f32 %v803, %v821
  %v842 = vadd.f32 %v771, %v826
  %v843 = vadd.f32 %v772, %v827
  %v844 = vadd.f32 %v773, %v828
  %v845 = vadd.f32 %v774, %v829
  %v846 = vadd.f32 %v775, %v830
  %v847 = vadd.f32 %v776, %v831
  %v848 = vadd.f32 %v777, %v832
  %v849 = vadd.f32 %v778, %v833
  %v850 = vadd.f32 %v779, %v834
  %v851 = vadd.f32 %v780, %v835
  %v852 = vadd.f32 %v781, %v836
  %v853 = vadd.f32 %v782, %v837
  %v854 = vadd.f32 %v783, %v838
  %v855 = vadd.f32 %v784, %v839
  %v856 = vadd.f32 %v785, %v840
  %v857 = vadd.f32 %v786, %v841
  %v858 = vld [vmem:[%s4] sm:$0xff]
  %v859 = vld [vmem:[%s4 + $0x8] sm:$0xff]
  %v860 = vld [vmem:[%s4 + $0x10] sm:$0xff]
  %v861 = vld [vmem:[%s4 + $0x18] sm:$0xff]
  %863 = vset.pattern.permute.xlu0 2
  %864 = vperm.xlu0 %863, %v858
  %v865 = vpop.permute.xlu0 %864
  %868 = vset.pattern.permute.xlu0 2
  %869 = vperm.xlu0 %868, %v859
  %v870 = vpop.permute.xlu0 %869
  %873 = vset.pattern.permute.xlu0 2
  %874 = vperm.xlu0 %873, %v860
  %v875 = vpop.permute.xlu0 %874
  %878 = vset.pattern.permute.xlu0 2
  %879 = vperm.xlu0 %878, %v861
  %v880 = vpop.permute.xlu0 %879
  %v882 = vadd.f32 %v842, %v865
  %v883 = vadd.f32 %v843, %v865
  %v884 = vadd.f32 %v844, %v865
  %v885 = vadd.f32 %v845, %v865
  %v886 = vadd.f32 %v846, %v870
  %v887 = vadd.f32 %v847, %v870
  %v888 = vadd.f32 %v848, %v870
  %v889 = vadd.f32 %v849, %v870
  %v890 = vadd.f32 %v850, %v875
  %v891 = vadd.f32 %v851, %v875
  %v892 = vadd.f32 %v852, %v875
  %v893 = vadd.f32 %v853, %v875
  %v894 = vadd.f32 %v854, %v880
  %v895 = vadd.f32 %v855, %v880
  %v896 = vadd.f32 %v856, %v880
  %v897 = vadd.f32 %v857, %v880
  %v898 = vmax.f32 %v882, 0.0
  %v899 = vmax.f32 %v883, 0.0
  %v900 = vmax.f32 %v884, 0.0
  %v901 = vmax.f32 %v885, 0.0
  %v902 = vmax.f32 %v886, 0.0
  %v903 = vmax.f32 %v887, 0.0
  %v904 = vmax.f32 %v888, 0.0
  %v905 = vmax.f32 %v889, 0.0
  %v906 = vmax.f32 %v890, 0.0
  %v907 = vmax.f32 %v891, 0.0
  %v908 = vmax.f32 %v892, 0.0
  %v909 = vmax.f32 %v893, 0.0
  %v910 = vmax.f32 %v894, 0.0
  %v911 = vmax.f32 %v895, 0.0
  %v912 = vmax.f32 %v896, 0.0
  %v913 = vmax.f32 %v897, 0.0
  %v914 = vld [vmem:[%s2] sm:$0x3]
  %v915 = vld [vmem:[%s3] sm:$0x3]
  %917 = vset.pattern.permute.xlu0 0
  %918 = vperm.xlu0 %917, %v915
  %v919 = vpop.permute.xlu0 %918
  %v922 = vsel %vm216, %v914, 0
  %924 = vmatprep.subr.mxu0 0.0
  %925 = vmatpush1.msra.mxu0 0.0
  %926 = vmatprep.subr.mxu0 0.0
  %927 = vmatpush1.msra.mxu0 0.0
  %928 = vmatprep.subr.mxu0 0.0
  %929 = vmatpush1.msra.mxu0 0.0
  %930 = vmatprep.subr.mxu0 0.0
  %931 = vmatpush1.msra.mxu0 0.0
  %932 = vmatprep.subr.mxu0 0.0
  %933 = vmatpush1.msra.mxu0 0.0
  %934 = vmatprep.subr.mxu0 0.0
  %935 = vmatpush1.msra.mxu0 0.0
  %936 = vmatprep.subr.mxu0 0.0
  %937 = vmatpush1.msra.mxu0 0.0
  %938 = vmatprep.subr.mxu0 0.0
  %939 = vmatpush1.msra.mxu0 0.0
  %940 = vmatprep.subr.mxu0 0.0
  %941 = vmatpush1.msra.mxu0 0.0
  %942 = vmatprep.subr.mxu0 0.0
  %943 = vmatpush1.msra.mxu0 0.0
  %944 = vmatprep.subr.mxu0 0.0
  %945 = vmatpush1.msra.mxu0 0.0
  %946 = vmatprep.subr.mxu0 0.0
  %947 = vmatpush1.msra.mxu0 0.0
  %948 = vmatprep.subr.mxu0 %v911
  %949 = vmatpush1.msra.mxu0 %v910
  %950 = vmatprep.subr.mxu0 %v907
  %951 = vmatpush1.msra.mxu0 %v906
  %952 = vmatprep.subr.mxu0 %v903
  %953 = vmatpush1.msra.mxu0 %v902
  %954 = vmatprep.subr.mxu0 %v899
  %955 = vmatpush1.msra.mxu0 %v898
  %956 = vmatprep.subr.mxu0 0.0
  %957 = vmatpush2.msra.mxu0 0.0
  %958 = vmatprep.subr.mxu0 0.0
  %959 = vmatpush2.msra.mxu0 0.0
  %960 = vmatprep.subr.mxu0 0.0
  %961 = vmatpush2.msra.mxu0 0.0
  %962 = vmatprep.subr.mxu0 0.0
  %963 = vmatpush2.msra.mxu0 0.0
  %964 = vmatprep.subr.mxu0 0.0
  %965 = vmatpush2.msra.mxu0 0.0
  %966 = vmatprep.subr.mxu0 0.0
  %967 = vmatpush2.msra.mxu0 0.0
  %968 = vmatprep.subr.mxu0 0.0
  %969 = vmatpush2.msra.mxu0 0.0
  %970 = vmatprep.subr.mxu0 0.0
  %971 = vmatpush2.msra.mxu0 0.0
  %972 = vmatprep.subr.mxu0 0.0
  %973 = vmatpush2.msra.mxu0 0.0
  %974 = vmatprep.subr.mxu0 0.0
  %975 = vmatpush2.msra.mxu0 0.0
  %976 = vmatprep.subr.mxu0 0.0
  %977 = vmatpush2.msra.mxu0 0.0
  %978 = vmatprep.subr.mxu0 0.0
  %979 = vmatpush2.msra.mxu0 0.0
  %980 = vmatprep.subr.mxu0 0.0
  %981 = vmatpush2.msra.mxu0 0.0
  %982 = vmatprep.subr.mxu0 0.0
  %983 = vmatpush2.msra.mxu0 0.0
  %984 = vmatprep.subr.mxu0 0.0
  %985 = vmatpush2.msra.mxu0 0.0
  %986 = vmatprep.subr.mxu0 0.0
  %987 = vmatpush2.msra.mxu0 0.0
  %988 = vmatprep.mubr.f32.mxu0 0.0
  %989 = vmatmul.mubr.f32.gmra.mxu0 %v922
  %v990 = vpop.f32.mrf.mxu0
  %v991 = vadd.f32 %v919, %v990
  %v992 = vpop.f32.mrf.mxu0
  %v993 = vadd.f32 %v919, %v992
  %994 = vdwg.mxu0
  %995 = vmatprep.subr.mxu0 0.0
  %996 = vmatpush1.msra.mxu0 0.0
  %997 = vmatprep.subr.mxu0 0.0
  %998 = vmatpush1.msra.mxu0 0.0
  %999 = vmatprep.subr.mxu0 0.0
  %1000 = vmatpush1.msra.mxu0 0.0
  %1001 = vmatprep.subr.mxu0 0.0
  %1002 = vmatpush1.msra.mxu0 0.0
  %1003 = vmatprep.subr.mxu0 0.0
  %1004 = vmatpush1.msra.mxu0 0.0
  %1005 = vmatprep.subr.mxu0 0.0
  %1006 = vmatpush1.msra.mxu0 0.0
  %1007 = vmatprep.subr.mxu0 0.0
  %1008 = vmatpush1.msra.mxu0 0.0
  %1009 = vmatprep.subr.mxu0 0.0
  %1010 = vmatpush1.msra.mxu0 0.0
  %1011 = vmatprep.subr.mxu0 0.0
  %1012 = vmatpush1.msra.mxu0 0.0
  %1013 = vmatprep.subr.mxu0 0.0
  %1014 = vmatpush1.msra.mxu0 0.0
  %1015 = vmatprep.subr.mxu0 0.0
  %1016 = vmatpush1.msra.mxu0 0.0
  %1017 = vmatprep.subr.mxu0 0.0
  %1018 = vmatpush1.msra.mxu0 0.0
  %1019 = vmatprep.subr.mxu0 %v913
  %1020 = vmatpush1.msra.mxu0 %v912
  %1021 = vmatprep.subr.mxu0 %v909
  %1022 = vmatpush1.msra.mxu0 %v908
  %1023 = vmatprep.subr.mxu0 %v905
  %1024 = vmatpush1.msra.mxu0 %v904
  %1025 = vmatprep.subr.mxu0 %v901
  %1026 = vmatpush1.msra.mxu0 %v900
  %1027 = vmatprep.subr.mxu0 0.0
  %1028 = vmatpush2.msra.mxu0 0.0
  %1029 = vmatprep.subr.mxu0 0.0
  %1030 = vmatpush2.msra.mxu0 0.0
  %1031 = vmatprep.subr.mxu0 0.0
  %1032 = vmatpush2.msra.mxu0 0.0
  %1033 = vmatprep.subr.mxu0 0.0
  %1034 = vmatpush2.msra.mxu0 0.0
  %1035 = vmatprep.subr.mxu0 0.0
  %1036 = vmatpush2.msra.mxu0 0.0
  %1037 = vmatprep.subr.mxu0 0.0
  %1038 = vmatpush2.msra.mxu0 0.0
  %1039 = vmatprep.subr.mxu0 0.0
  %1040 = vmatpush2.msra.mxu0 0.0
  %1041 = vmatprep.subr.mxu0 0.0
  %1042 = vmatpush2.msra.mxu0 0.0
  %1043 = vmatprep.subr.mxu0 0.0
  %1044 = vmatpush2.msra.mxu0 0.0
  %1045 = vmatprep.subr.mxu0 0.0
  %1046 = vmatpush2.msra.mxu0 0.0
  %1047 = vmatprep.subr.mxu0 0.0
  %1048 = vmatpush2.msra.mxu0 0.0
  %1049 = vmatprep.subr.mxu0 0.0
  %1050 = vmatpush2.msra.mxu0 0.0
  %1051 = vmatprep.subr.mxu0 0.0
  %1052 = vmatpush2.msra.mxu0 0.0
  %1053 = vmatprep.subr.mxu0 0.0
  %1054 = vmatpush2.msra.mxu0 0.0
  %1055 = vmatprep.subr.mxu0 0.0
  %1056 = vmatpush2.msra.mxu0 0.0
  %1057 = vmatprep.subr.mxu0 0.0
  %1058 = vmatpush2.msra.mxu0 0.0
  %1059 = vmatprep.mubr.f32.mxu0 0.0
  %1060 = vmatmul.mubr.f32.gmra.mxu0 %v922
  %v1061 = vpop.f32.mrf.mxu0
  %v1062 = vadd.f32 %v919, %v1061
  %v1063 = vpop.f32.mrf.mxu0
  %v1064 = vadd.f32 %v919, %v1063
  %1065 = vdwg.mxu0
  %v1070 = vrot.slane %v991, 4
  %v1071 = vrot.slane %v993, 4
  %v1072 = vrot.slane %v1062, 4
  %v1073 = vrot.slane %v1064, 4
  %1078 = vst [vmem:[%s5] sm:$0x30] %v1070
  %1079 = vst [vmem:[%s5 + $0x8] sm:$0x30] %v1071
  %1080 = vst [vmem:[%s5 + $0x10] sm:$0x30] %v1072
  %1081 = vst [vmem:[%s5 + $0x18] sm:$0x30] %v1073
  %v1082 = vld [vmem:[%s1] sm:$0xff]
  %v1083 = vld [vmem:[%s1 + $0x8] sm:$0xff]
  %v1084 = vld [vmem:[%s1 + $0x10] sm:$0xff]
  %v1085 = vld [vmem:[%s1 + $0x18] sm:$0xff]
  %s1086 = scalar_lea.vmem %s0, 6
  %v1087 = vld [vmem:[%s1086] ss:$8 sm:$0xf]
  %1089 = vset.pattern.permute.xlu0 0
  %1090 = vperm.xlu0 %1089, %v1082
  %v1091 = vpop.permute.xlu0 %1090
  %1094 = vset.pattern.permute.xlu0 0
  %1095 = vperm.xlu0 %1094, %v1083
  %v1096 = vpop.permute.xlu0 %1095
  %1099 = vset.pattern.permute.xlu0 0
  %1100 = vperm.xlu0 %1099, %v1084
  %v1101 = vpop.permute.xlu0 %1100
  %1104 = vset.pattern.permute.xlu0 0
  %1105 = vperm.xlu0 %1104, %v1085
  %v1106 = vpop.permute.xlu0 %1105
  %v1109 = vlaneseq
  %v1110 = vshrl.u32 %v1109, 7
  %v1111 = vsub.s32 0, %v1110
  %v1112 = vrot.slane %v1087, %v1111
  %v1113 = vlaneseq
  %v1114 = vshrl.u32 %v1113, 7
  %v1115 = vsub.s32 1, %v1114
  %v1116 = vrot.slane %v1087, %v1115
  %v1117 = vlaneseq
  %v1118 = vshrl.u32 %v1117, 7
  %v1119 = vsub.s32 2, %v1118
  %v1120 = vrot.slane %v1087, %v1119
  %v1121 = vlaneseq
  %v1122 = vshrl.u32 %v1121, 7
  %v1123 = vsub.s32 3, %v1122
  %v1124 = vrot.slane %v1087, %v1123
  %v1129 = vmul.f32 %v1091, %v1112
  %v1130 = vmul.f32 %v1091, %v1116
  %v1131 = vmul.f32 %v1091, %v1120
  %v1132 = vmul.f32 %v1091, %v1124
  %v1133 = vmul.f32 %v1096, %v1112
  %v1134 = vmul.f32 %v1096, %v1116
  %v1135 = vmul.f32 %v1096, %v1120
  %v1136 = vmul.f32 %v1096, %v1124
  %v1137 = vmul.f32 %v1101, %v1112
  %v1138 = vmul.f32 %v1101, %v1116
  %v1139 = vmul.f32 %v1101, %v1120
  %v1140 = vmul.f32 %v1101, %v1124
  %v1141 = vmul.f32 %v1106, %v1112
  %v1142 = vmul.f32 %v1106, %v1116
  %v1143 = vmul.f32 %v1106, %v1120
  %v1144 = vmul.f32 %v1106, %v1124
  %s1145 = scalar_lea.vmem %s0, 7
  %v1146 = vld [vmem:[%s1145] ss:$8 sm:$0xf]
  %1147 = vset.pattern.permute.xlu0 1
  %1148 = vperm.xlu0 %1147, %v1082
  %v1149 = vpop.permute.xlu0 %1148
  %1151 = vset.pattern.permute.xlu0 1
  %1152 = vperm.xlu0 %1151, %v1083
  %v1153 = vpop.permute.xlu0 %1152
  %1155 = vset.pattern.permute.xlu0 1
  %1156 = vperm.xlu0 %1155, %v1084
  %v1157 = vpop.permute.xlu0 %1156
  %1159 = vset.pattern.permute.xlu0 1
  %1160 = vperm.xlu0 %1159, %v1085
  %v1161 = vpop.permute.xlu0 %1160
  %v1164 = vlaneseq
  %v1165 = vshrl.u32 %v1164, 7
  %v1166 = vsub.s32 0, %v1165
  %v1167 = vrot.slane %v1146, %v1166
  %v1168 = vlaneseq
  %v1169 = vshrl.u32 %v1168, 7
  %v1170 = vsub.s32 1, %v1169
  %v1171 = vrot.slane %v1146, %v1170
  %v1172 = vlaneseq
  %v1173 = vshrl.u32 %v1172, 7
  %v1174 = vsub.s32 2, %v1173
  %v1175 = vrot.slane %v1146, %v1174
  %v1176 = vlaneseq
  %v1177 = vshrl.u32 %v1176, 7
  %v1178 = vsub.s32 3, %v1177
  %v1179 = vrot.slane %v1146, %v1178
  %v1184 = vmul.f32 %v1149, %v1167
  %v1185 = vmul.f32 %v1149, %v1171
  %v1186 = vmul.f32 %v1149, %v1175
  %v1187 = vmul.f32 %v1149, %v1179
  %v1188 = vmul.f32 %v1153, %v1167
  %v1189 = vmul.f32 %v1153, %v1171
  %v1190 = vmul.f32 %v1153, %v1175
  %v1191 = vmul.f32 %v1153, %v1179
  %v1192 = vmul.f32 %v1157, %v1167
  %v1193 = vmul.f32 %v1157, %v1171
  %v1194 = vmul.f32 %v1157, %v1175
  %v1195 = vmul.f32 %v1157, %v1179
  %v1196 = vmul.f32 %v1161, %v1167
  %v1197 = vmul.f32 %v1161, %v1171
  %v1198 = vmul.f32 %v1161, %v1175
  %v1199 = vmul.f32 %v1161, %v1179
  %v1200 = vadd.f32 %v1129, %v1184
  %v1201 = vadd.f32 %v1130, %v1185
  %v1202 = vadd.f32 %v1131, %v1186
  %v1203 = vadd.f32 %v1132, %v1187
  %v1204 = vadd.f32 %v1133, %v1188
  %v1205 = vadd.f32 %v1134, %v1189
  %v1206 = vadd.f32 %v1135, %v1190
  %v1207 = vadd.f32 %v1136, %v1191
  %v1208 = vadd.f32 %v1137, %v1192
  %v1209 = vadd.f32 %v1138, %v1193
  %v1210 = vadd.f32 %v1139, %v1194
  %v1211 = vadd.f32 %v1140, %v1195
  %v1212 = vadd.f32 %v1141, %v1196
  %v1213 = vadd.f32 %v1142, %v1197
  %v1214 = vadd.f32 %v1143, %v1198
  %v1215 = vadd.f32 %v1144, %v1199
  %v1216 = vld [vmem:[%s4] sm:$0xff]
  %v1217 = vld [vmem:[%s4 + $0x8] sm:$0xff]
  %v1218 = vld [vmem:[%s4 + $0x10] sm:$0xff]
  %v1219 = vld [vmem:[%s4 + $0x18] sm:$0xff]
  %1221 = vset.pattern.permute.xlu0 3
  %1222 = vperm.xlu0 %1221, %v1216
  %v1223 = vpop.permute.xlu0 %1222
  %1226 = vset.pattern.permute.xlu0 3
  %1227 = vperm.xlu0 %1226, %v1217
  %v1228 = vpop.permute.xlu0 %1227
  %1231 = vset.pattern.permute.xlu0 3
  %1232 = vperm.xlu0 %1231, %v1218
  %v1233 = vpop.permute.xlu0 %1232
  %1236 = vset.pattern.permute.xlu0 3
  %1237 = vperm.xlu0 %1236, %v1219
  %v1238 = vpop.permute.xlu0 %1237
  %v1240 = vadd.f32 %v1200, %v1223
  %v1241 = vadd.f32 %v1201, %v1223
  %v1242 = vadd.f32 %v1202, %v1223
  %v1243 = vadd.f32 %v1203, %v1223
  %v1244 = vadd.f32 %v1204, %v1228
  %v1245 = vadd.f32 %v1205, %v1228
  %v1246 = vadd.f32 %v1206, %v1228
  %v1247 = vadd.f32 %v1207, %v1228
  %v1248 = vadd.f32 %v1208, %v1233
  %v1249 = vadd.f32 %v1209, %v1233
  %v1250 = vadd.f32 %v1210, %v1233
  %v1251 = vadd.f32 %v1211, %v1233
  %v1252 = vadd.f32 %v1212, %v1238
  %v1253 = vadd.f32 %v1213, %v1238
  %v1254 = vadd.f32 %v1214, %v1238
  %v1255 = vadd.f32 %v1215, %v1238
  %v1256 = vmax.f32 %v1240, 0.0
  %v1257 = vmax.f32 %v1241, 0.0
  %v1258 = vmax.f32 %v1242, 0.0
  %v1259 = vmax.f32 %v1243, 0.0
  %v1260 = vmax.f32 %v1244, 0.0
  %v1261 = vmax.f32 %v1245, 0.0
  %v1262 = vmax.f32 %v1246, 0.0
  %v1263 = vmax.f32 %v1247, 0.0
  %v1264 = vmax.f32 %v1248, 0.0
  %v1265 = vmax.f32 %v1249, 0.0
  %v1266 = vmax.f32 %v1250, 0.0
  %v1267 = vmax.f32 %v1251, 0.0
  %v1268 = vmax.f32 %v1252, 0.0
  %v1269 = vmax.f32 %v1253, 0.0
  %v1270 = vmax.f32 %v1254, 0.0
  %v1271 = vmax.f32 %v1255, 0.0
  %v1272 = vld [vmem:[%s2] sm:$0x3]
  %v1273 = vld [vmem:[%s3] sm:$0x3]
  %1275 = vset.pattern.permute.xlu0 0
  %1276 = vperm.xlu0 %1275, %v1273
  %v1277 = vpop.permute.xlu0 %1276
  %v1280 = vsel %vm216, %v1272, 0
  %1282 = vmatprep.subr.mxu0 0.0
  %1283 = vmatpush1.msra.mxu0 0.0
  %1284 = vmatprep.subr.mxu0 0.0
  %1285 = vmatpush1.msra.mxu0 0.0
  %1286 = vmatprep.subr.mxu0 0.0
  %1287 = vmatpush1.msra.mxu0 0.0
  %1288 = vmatprep.subr.mxu0 0.0
  %1289 = vmatpush1.msra.mxu0 0.0
  %1290 = vmatprep.subr.mxu0 0.0
  %1291 = vmatpush1.msra.mxu0 0.0
  %1292 = vmatprep.subr.mxu0 0.0
  %1293 = vmatpush1.msra.mxu0 0.0
  %1294 = vmatprep.subr.mxu0 0.0
  %1295 = vmatpush1.msra.mxu0 0.0
  %1296 = vmatprep.subr.mxu0 0.0
  %1297 = vmatpush1.msra.mxu0 0.0
  %1298 = vmatprep.subr.mxu0 0.0
  %1299 = vmatpush1.msra.mxu0 0.0
  %1300 = vmatprep.subr.mxu0 0.0
  %1301 = vmatpush1.msra.mxu0 0.0
  %1302 = vmatprep.subr.mxu0 0.0
  %1303 = vmatpush1.msra.mxu0 0.0
  %1304 = vmatprep.subr.mxu0 0.0
  %1305 = vmatpush1.msra.mxu0 0.0
  %1306 = vmatprep.subr.mxu0 %v1269
  %1307 = vmatpush1.msra.mxu0 %v1268
  %1308 = vmatprep.subr.mxu0 %v1265
  %1309 = vmatpush1.msra.mxu0 %v1264
  %1310 = vmatprep.subr.mxu0 %v1261
  %1311 = vmatpush1.msra.mxu0 %v1260
  %1312 = vmatprep.subr.mxu0 %v1257
  %1313 = vmatpush1.msra.mxu0 %v1256
  %1314 = vmatprep.subr.mxu0 0.0
  %1315 = vmatpush2.msra.mxu0 0.0
  %1316 = vmatprep.subr.mxu0 0.0
  %1317 = vmatpush2.msra.mxu0 0.0
  %1318 = vmatprep.subr.mxu0 0.0
  %1319 = vmatpush2.msra.mxu0 0.0
  %1320 = vmatprep.subr.mxu0 0.0
  %1321 = vmatpush2.msra.mxu0 0.0
  %1322 = vmatprep.subr.mxu0 0.0
  %1323 = vmatpush2.msra.mxu0 0.0
  %1324 = vmatprep.subr.mxu0 0.0
  %1325 = vmatpush2.msra.mxu0 0.0
  %1326 = vmatprep.subr.mxu0 0.0
  %1327 = vmatpush2.msra.mxu0 0.0
  %1328 = vmatprep.subr.mxu0 0.0
  %1329 = vmatpush2.msra.mxu0 0.0
  %1330 = vmatprep.subr.mxu0 0.0
  %1331 = vmatpush2.msra.mxu0 0.0
  %1332 = vmatprep.subr.mxu0 0.0
  %1333 = vmatpush2.msra.mxu0 0.0
  %1334 = vmatprep.subr.mxu0 0.0
  %1335 = vmatpush2.msra.mxu0 0.0
  %1336 = vmatprep.subr.mxu0 0.0
  %1337 = vmatpush2.msra.mxu0 0.0
  %1338 = vmatprep.subr.mxu0 0.0
  %1339 = vmatpush2.msra.mxu0 0.0
  %1340 = vmatprep.subr.mxu0 0.0
  %1341 = vmatpush2.msra.mxu0 0.0
  %1342 = vmatprep.subr.mxu0 0.0
  %1343 = vmatpush2.msra.mxu0 0.0
  %1344 = vmatprep.subr.mxu0 0.0
  %1345 = vmatpush2.msra.mxu0 0.0
  %1346 = vmatprep.mubr.f32.mxu0 0.0
  %1347 = vmatmul.mubr.f32.gmra.mxu0 %v1280
  %v1348 = vpop.f32.mrf.mxu0
  %v1349 = vadd.f32 %v1277, %v1348
  %v1350 = vpop.f32.mrf.mxu0
  %v1351 = vadd.f32 %v1277, %v1350
  %1352 = vdwg.mxu0
  %1353 = vmatprep.subr.mxu0 0.0
  %1354 = vmatpush1.msra.mxu0 0.0
  %1355 = vmatprep.subr.mxu0 0.0
  %1356 = vmatpush1.msra.mxu0 0.0
  %1357 = vmatprep.subr.mxu0 0.0
  %1358 = vmatpush1.msra.mxu0 0.0
  %1359 = vmatprep.subr.mxu0 0.0
  %1360 = vmatpush1.msra.mxu0 0.0
  %1361 = vmatprep.subr.mxu0 0.0
  %1362 = vmatpush1.msra.mxu0 0.0
  %1363 = vmatprep.subr.mxu0 0.0
  %1364 = vmatpush1.msra.mxu0 0.0
  %1365 = vmatprep.subr.mxu0 0.0
  %1366 = vmatpush1.msra.mxu0 0.0
  %1367 = vmatprep.subr.mxu0 0.0
  %1368 = vmatpush1.msra.mxu0 0.0
  %1369 = vmatprep.subr.mxu0 0.0
  %1370 = vmatpush1.msra.mxu0 0.0
  %1371 = vmatprep.subr.mxu0 0.0
  %1372 = vmatpush1.msra.mxu0 0.0
  %1373 = vmatprep.subr.mxu0 0.0
  %1374 = vmatpush1.msra.mxu0 0.0
  %1375 = vmatprep.subr.mxu0 0.0
  %1376 = vmatpush1.msra.mxu0 0.0
  %1377 = vmatprep.subr.mxu0 %v1271
  %1378 = vmatpush1.msra.mxu0 %v1270
  %1379 = vmatprep.subr.mxu0 %v1267
  %1380 = vmatpush1.msra.mxu0 %v1266
  %1381 = vmatprep.subr.mxu0 %v1263
  %1382 = vmatpush1.msra.mxu0 %v1262
  %1383 = vmatprep.subr.mxu0 %v1259
  %1384 = vmatpush1.msra.mxu0 %v1258
  %1385 = vmatprep.subr.mxu0 0.0
  %1386 = vmatpush2.msra.mxu0 0.0
  %1387 = vmatprep.subr.mxu0 0.0
  %1388 = vmatpush2.msra.mxu0 0.0
  %1389 = vmatprep.subr.mxu0 0.0
  %1390 = vmatpush2.msra.mxu0 0.0
  %1391 = vmatprep.subr.mxu0 0.0
  %1392 = vmatpush2.msra.mxu0 0.0
  %1393 = vmatprep.subr.mxu0 0.0
  %1394 = vmatpush2.msra.mxu0 0.0
  %1395 = vmatprep.subr.mxu0 0.0
  %1396 = vmatpush2.msra.mxu0 0.0
  %1397 = vmatprep.subr.mxu0 0.0
  %1398 = vmatpush2.msra.mxu0 0.0
  %1399 = vmatprep.subr.mxu0 0.0
  %1400 = vmatpush2.msra.mxu0 0.0
  %1401 = vmatprep.subr.mxu0 0.0
  %1402 = vmatpush2.msra.mxu0 0.0
  %1403 = vmatprep.subr.mxu0 0.0
  %1404 = vmatpush2.msra.mxu0 0.0
  %1405 = vmatprep.subr.mxu0 0.0
  %1406 = vmatpush2.msra.mxu0 0.0
  %1407 = vmatprep.subr.mxu0 0.0
  %1408 = vmatpush2.msra.mxu0 0.0
  %1409 = vmatprep.subr.mxu0 0.0
  %1410 = vmatpush2.msra.mxu0 0.0
  %1411 = vmatprep.subr.mxu0 0.0
  %1412 = vmatpush2.msra.mxu0 0.0
  %1413 = vmatprep.subr.mxu0 0.0
  %1414 = vmatpush2.msra.mxu0 0.0
  %1415 = vmatprep.subr.mxu0 0.0
  %1416 = vmatpush2.msra.mxu0 0.0
  %1417 = vmatprep.mubr.f32.mxu0 0.0
  %1418 = vmatmul.mubr.f32.gmra.mxu0 %v1280
  %v1419 = vpop.f32.mrf.mxu0
  %v1420 = vadd.f32 %v1277, %v1419
  %v1421 = vpop.f32.mrf.mxu0
  %v1422 = vadd.f32 %v1277, %v1421
  %1423 = vdwg.mxu0
  %v1428 = vrot.slane %v1349, 2
  %v1429 = vrot.slane %v1351, 2
  %v1430 = vrot.slane %v1420, 2
  %v1431 = vrot.slane %v1422, 2
  %1436 = vst [vmem:[%s5] sm:$0xc0] %v1428
  %1437 = vst [vmem:[%s5 + $0x8] sm:$0xc0] %v1429
  %1438 = vst [vmem:[%s5 + $0x10] sm:$0xc0] %v1430
  %1439 = vst [vmem:[%s5 + $0x18] sm:$0xc0] %v1431
  // Predicated region
  $region22: #{flow_forward.1} parent=0 // pred_check
    _
  $region23: #{flow_forward.1} parent=0 // pred_check_branch
    %1441 = sbr.rel (0) target = $region25
  $region24: #{flow_forward.1} parent=0 // pred_region
    _
  $region25: #{flow_forward.1} parent=0 // pred_fallthru
    _
  // Predicated region
  $region26: #{flow_forward.1} parent=0 // pred_check
    _
  $region27: #{flow_forward.1} parent=0 // pred_check_branch
    %1443 = sbr.rel (0) target = $region29
  $region28: #{flow_forward.1} parent=0 // pred_region
    _
  $region29: #{flow_forward.1} parent=0 // pred_fallthru
    _

</llo_original>
